<compile_context>
chip_gen: v7x
topology: tpu7x:2x2x1
jax: 0.10.0
libtpu: 0.0.40
codegen_flags: <defaults>
</compile_context>

<pallas_src>
import jax
import jax.numpy as jnp
from jax.experimental import pallas as pl
from jax.experimental.pallas import tpu as pltpu

LANE = 128


def _round_up(x, m):
    return (x + m - 1) // m * m


# ----------------------------- Pallas kernel ------------------------------ #
def _dynamics_kernel(qpos_ref, qvel_ref, ctrl_ref,
                     w1q_ref, w1v_ref, w1u_ref, b1_ref,
                     w2q_ref, w2v_ref, b2q_ref, b2v_ref,
                     new_qpos_ref, new_qvel_ref):
    """new_qpos = qpos + MLP(x)[:, :nq]; new_qvel = qvel + MLP(x)[:, nq:].

    The concat of [qpos, qvel, ctrl] is realized implicitly by summing three
    matmuls against the corresponding row-blocks of w1; the split of the MLP
    output is realized by two matmuls against the column-blocks of w2.
    """
    qpos = qpos_ref[...]                       # [TB, nq]  f32
    qvel = qvel_ref[...]                       # [TB, nv]  f32
    ctrl = ctrl_ref[...]                       # [TB, nu]  f32

    # Layer 1: bf16 MXU operands, f32 accumulate.
    h = jnp.dot(qpos.astype(jnp.bfloat16), w1q_ref[...],
                preferred_element_type=jnp.float32)
    h = h + jnp.dot(qvel.astype(jnp.bfloat16), w1v_ref[...],
                    preferred_element_type=jnp.float32)
    h = h + jnp.dot(ctrl.astype(jnp.bfloat16), w1u_ref[...],
                    preferred_element_type=jnp.float32)
    h = jnp.maximum(h + b1_ref[...], 0.0)      # bias + ReLU in f32 (v5e-safe)

    hb = h.astype(jnp.bfloat16)                # [TB, H_PAD] lane-dense
    # Layer 2 split by output columns, fused with the MuJoCoDelta residual add.
    new_qpos_ref[...] = qpos + (
        jnp.dot(hb, w2q_ref[...], preferred_element_type=jnp.float32)
        + b2q_ref[...])
    new_qvel_ref[...] = qvel + (
        jnp.dot(hb, w2v_ref[...], preferred_element_type=jnp.float32)
        + b2v_ref[...])


# ------------------------------- Wrapper ----------------------------------- #
def mujoco_dynamics_forward(qpos, qvel, ctrl, params, extra=None, obs=None):
    """Mirrors MuJoCoDynamics.forward semantics.

    qpos: [B, nq], qvel: [B, nv], ctrl: [B, nu], optional extra: [B, ne].
    Returns (new_qpos [B, nq], new_qvel [B, nv]).
    """
    nq = qpos.shape[-1]
    nv = qvel.shape[-1]
    B = qpos.shape[0]

    # In the reference module `obs` (when given) is just a precomputed
    # cat([qpos, qvel]); the fused kernel rebuilds the MLP input from
    # qpos/qvel, so the duplicate tensor is not needed.
    # TODO(synk): an obs override that differs from cat([qpos, qvel]) is not
    # supported by this fused path.
    del obs

    if extra is not None:
        # `extra` rides along with ctrl through the w1_u row-block.
        ctrl = jnp.concatenate([ctrl, extra], axis=-1)
    nu = ctrl.shape[-1]

    w1q, w1v, w1u = params["w1_q"], params["w1_v"], params["w1_u"]
    b1 = params["b1"]
    w2q, w2v = params["w2_q"], params["w2_v"]
    b2q, b2v = params["b2_q"], params["b2_v"]
    assert w1u.shape[0] == nu, "ctrl(+extra) width must match w1_u rows"
    hp = w1q.shape[1]

    # Batch tile: largest divisor of B from a multiple-of-8 ladder.  Tiles are
    # tiny (<< 64 MiB v7x VMEM) even double-buffered, so no vmem_limit needed.
    tb = B
    for cand in (1024, 512, 256, 128, 64, 32, 16, 8):
        if B % cand == 0:
            tb = cand
            break
    grid = (B // tb,)

    def row_spec(d):
        return pl.BlockSpec((tb, d), lambda i: (i, 0))

    def resident_spec(arr):
        # Constant index_map -> block stays resident in VMEM across the grid.
        return pl.BlockSpec(arr.shape, lambda i: (0, 0))

    flops = 2 * B * ((nq + nv + nu) * hp + hp * (nq + nv))
    bytes_accessed = 4 * B * 2 * (nq + nv + nu) + sum(
        int(p.size) * p.dtype.itemsize
        for p in (w1q, w1v, w1u, b1, w2q, w2v, b2q, b2v))

    new_qpos, new_qvel = pl.pallas_call(
        _dynamics_kernel,
        out_shape=(jax.ShapeDtypeStruct((B, nq), jnp.float32),
                   jax.ShapeDtypeStruct((B, nv), jnp.float32)),
        grid=grid,
        in_specs=[row_spec(nq), row_spec(nv), row_spec(nu),
                  resident_spec(w1q), resident_spec(w1v), resident_spec(w1u),
                  resident_spec(b1),
                  resident_spec(w2q), resident_spec(w2v),
                  resident_spec(b2q), resident_spec(b2v)],
        out_specs=(row_spec(nq), row_spec(nv)),
        compiler_params=pltpu.CompilerParams(
            dimension_semantics=("parallel",)),
        cost_estimate=pl.CostEstimate(flops=flops, transcendentals=0,
                                      bytes_accessed=bytes_accessed),
    )(qpos, qvel, ctrl, w1q, w1v, w1u, b1, w2q, w2v, b2q, b2v)
    return new_qpos, new_qvel


# --------------------------- Parameter creation ---------------------------- #
def make_params(key, nq, nv, nu, hidden):
    """Deterministic MLP params (equivalent of `self.model`), pre-laid-out
    for the kernel: w1 split by input row-blocks, w2 split by output column
    blocks, hidden axis zero-padded to a multiple of 128, weights in bf16,
    biases in f32."""
    in_dim = nq + nv + nu
    out_dim = nq + nv
    hp = _round_up(hidden, LANE)

    k1, k2, k3, k4 = jax.random.split(key, 4)
    s1 = 1.0 / jnp.sqrt(in_dim)
    s2 = 1.0 / jnp.sqrt(hidden)
    w1 = jax.random.uniform(k1, (in_dim, hidden), jnp.float32, -s1, s1)
    b1 = jax.random.uniform(k2, (1, hidden), jnp.float32, -s1, s1)
    w2 = jax.random.uniform(k3, (hidden, out_dim), jnp.float32, -s2, s2)
    b2 = jax.random.uniform(k4, (1, out_dim), jnp.float32, -s2, s2)

    # Zero-pad the hidden axis: padded units get b1=0 and zero w2 rows, so
    # they contribute nothing to the output.
    w1p = jnp.zeros((in_dim, hp), jnp.float32).at[:, :hidden].set(w1)
    b1p = jnp.zeros((1, hp), jnp.float32).at[:, :hidden].set(b1)
    w2p = jnp.zeros((hp, out_dim), jnp.float32).at[:hidden, :].set(w2)

    bf16 = jnp.bfloat16
    return {
        "w1_q": w1p[:nq].astype(bf16),
        "w1_v": w1p[nq:nq + nv].astype(bf16),
        "w1_u": w1p[nq + nv:].astype(bf16),
        "b1": b1p,                       # f32: elementwise stays f32
        "w2_q": w2p[:, :nq].astype(bf16),
        "w2_v": w2p[:, nq:].astype(bf16),
        "b2_q": b2[:, :nq],
        "b2_v": b2[:, nq:],
    }


# --------------------------------- Main ------------------------------------ #
if __name__ == "__main__":
    # MuJoCo-like shapes: nq = nv = 4, nu = 2, hidden = 32; batch 256 so the
    # grid (2 tiles of 128 rows) exercises tiling + resident weights.
    B, nq, nv, nu, hidden = 256, 4, 4, 2, 32

    key = jax.random.PRNGKey(0)
    kq, kv, kc, kp = jax.random.split(key, 4)

    qpos = jax.random.normal(kq, (B, nq), jnp.float32)
    qvel = jax.random.normal(kv, (B, nv), jnp.float32)
    ctrl = jax.random.normal(kc, (B, nu), jnp.float32)
    params = make_params(kp, nq, nv, nu, hidden)

    fwd = jax.jit(mujoco_dynamics_forward)
    new_qpos, new_qvel = fwd(qpos, qvel, ctrl, params)
    jax.block_until_ready((new_qpos, new_qvel))

    # Pure-JAX reference with the same math (bf16 MXU operands, f32 accumulate).
    f32, bf16 = jnp.float32, jnp.bfloat16
    h_ref = (jnp.dot(qpos.astype(bf16), params["w1_q"], preferred_element_type=f32)
             + jnp.dot(qvel.astype(bf16), params["w1_v"], preferred_element_type=f32)
             + jnp.dot(ctrl.astype(bf16), params["w1_u"], preferred_element_type=f32)
             + params["b1"])
    h_ref = jnp.maximum(h_ref, 0.0).astype(bf16)
    ref_qpos = qpos + jnp.dot(h_ref, params["w2_q"],
                              preferred_element_type=f32) + params["b2_q"]
    ref_qvel = qvel + jnp.dot(h_ref, params["w2_v"],
                              preferred_element_type=f32) + params["b2_v"]

    assert new_qpos.shape == (B, nq) and new_qvel.shape == (B, nv)
    assert jnp.allclose(new_qpos, ref_qpos, atol=2e-2, rtol=2e-2)
    assert jnp.allclose(new_qvel, ref_qvel, atol=2e-2, rtol=2e-2)

    print("KERNEL_OK")
</pallas_src>

<mosaic_0001>
module attributes {stable_mosaic.version = 11 : i64} {
  func.func @_dynamics_kernel(%arg0: i32, %arg1: memref<256x4xf32, #tpu.memory_space<vmem>>, %arg2: memref<256x4xf32, #tpu.memory_space<vmem>>, %arg3: memref<256x2xf32, #tpu.memory_space<vmem>>, %arg4: memref<4x128xbf16, #tpu.memory_space<vmem>>, %arg5: memref<4x128xbf16, #tpu.memory_space<vmem>>, %arg6: memref<2x128xbf16, #tpu.memory_space<vmem>>, %arg7: memref<1x128xf32, #tpu.memory_space<vmem>>, %arg8: memref<128x4xbf16, #tpu.memory_space<vmem>>, %arg9: memref<128x4xbf16, #tpu.memory_space<vmem>>, %arg10: memref<1x4xf32, #tpu.memory_space<vmem>>, %arg11: memref<1x4xf32, #tpu.memory_space<vmem>>, %arg12: memref<256x4xf32, #tpu.memory_space<vmem>>, %arg13: memref<256x4xf32, #tpu.memory_space<vmem>>) attributes {dimension_semantics = [#tpu.dimension_semantics<parallel>], iteration_bounds = array<i64: 1>, scalar_prefetch = 0 : i64, scratch_operands = 0 : i64, tpu.core_type = #tpu.core_type<tc>, window_params = [{transform_indices = @transform_0, window_bounds = array<i64: 256, 4>}, {transform_indices = @transform_1, window_bounds = array<i64: 256, 4>}, {transform_indices = @transform_2, window_bounds = array<i64: 256, 2>}, {pipeline_mode = #tpu.pipeline_mode<synchronous>, transform_indices = @transform_3, window_bounds = array<i64: 4, 128>}, {pipeline_mode = #tpu.pipeline_mode<synchronous>, transform_indices = @transform_4, window_bounds = array<i64: 4, 128>}, {pipeline_mode = #tpu.pipeline_mode<synchronous>, transform_indices = @transform_5, window_bounds = array<i64: 2, 128>}, {pipeline_mode = #tpu.pipeline_mode<synchronous>, transform_indices = @transform_6, window_bounds = array<i64: 1, 128>}, {pipeline_mode = #tpu.pipeline_mode<synchronous>, transform_indices = @transform_7, window_bounds = array<i64: 128, 4>}, {pipeline_mode = #tpu.pipeline_mode<synchronous>, transform_indices = @transform_8, window_bounds = array<i64: 128, 4>}, {pipeline_mode = #tpu.pipeline_mode<synchronous>, transform_indices = @transform_9, window_bounds = array<i64: 1, 4>}, {pipeline_mode = #tpu.pipeline_mode<synchronous>, transform_indices = @transform_10, window_bounds = array<i64: 1, 4>}, {transform_indices = @transform_11, window_bounds = array<i64: 256, 4>}, {transform_indices = @transform_12, window_bounds = array<i64: 256, 4>}]} {
    %c0 = arith.constant 0 : index
    %c0_0 = arith.constant 0 : index
    %0 = vector.load %arg1[%c0, %c0_0] : memref<256x4xf32, #tpu.memory_space<vmem>>, vector<256x4xf32>
    %c0_1 = arith.constant 0 : index
    %c0_2 = arith.constant 0 : index
    %1 = vector.load %arg2[%c0_1, %c0_2] : memref<256x4xf32, #tpu.memory_space<vmem>>, vector<256x4xf32>
    %c0_3 = arith.constant 0 : index
    %c0_4 = arith.constant 0 : index
    %2 = vector.load %arg3[%c0_3, %c0_4] : memref<256x2xf32, #tpu.memory_space<vmem>>, vector<256x2xf32>
    %3 = arith.truncf %0 : vector<256x4xf32> to vector<256x4xbf16>
    %c0_5 = arith.constant 0 : index
    %c0_6 = arith.constant 0 : index
    %4 = vector.load %arg4[%c0_5, %c0_6] : memref<4x128xbf16, #tpu.memory_space<vmem>>, vector<4x128xbf16>
    %cst = arith.constant dense<0.000000e+00> : vector<256x128xf32>
    %5 = tpu.matmul %3, %4, %cst {dimension_numbers = #tpu.dot_dimension_numbers<[1], [0], [0], [1], [0, 0, 1, 1], [], []>} : vector<256x4xbf16>, vector<4x128xbf16>, vector<256x128xf32> -> vector<256x128xf32>
    %6 = arith.truncf %1 : vector<256x4xf32> to vector<256x4xbf16>
    %c0_7 = arith.constant 0 : index
    %c0_8 = arith.constant 0 : index
    %7 = vector.load %arg5[%c0_7, %c0_8] : memref<4x128xbf16, #tpu.memory_space<vmem>>, vector<4x128xbf16>
    %cst_9 = arith.constant dense<0.000000e+00> : vector<256x128xf32>
    %8 = tpu.matmul %6, %7, %cst_9 {dimension_numbers = #tpu.dot_dimension_numbers<[1], [0], [0], [1], [0, 0, 1, 1], [], []>} : vector<256x4xbf16>, vector<4x128xbf16>, vector<256x128xf32> -> vector<256x128xf32>
    %9 = arith.addf %5, %8 : vector<256x128xf32>
    %10 = arith.truncf %2 : vector<256x2xf32> to vector<256x2xbf16>
    %c0_10 = arith.constant 0 : index
    %c0_11 = arith.constant 0 : index
    %11 = vector.load %arg6[%c0_10, %c0_11] : memref<2x128xbf16, #tpu.memory_space<vmem>>, vector<2x128xbf16>
    %cst_12 = arith.constant dense<0.000000e+00> : vector<256x128xf32>
    %12 = tpu.matmul %10, %11, %cst_12 {dimension_numbers = #tpu.dot_dimension_numbers<[1], [0], [0], [1], [0, 0, 1, 1], [], []>} : vector<256x2xbf16>, vector<2x128xbf16>, vector<256x128xf32> -> vector<256x128xf32>
    %13 = arith.addf %9, %12 : vector<256x128xf32>
    %c0_13 = arith.constant 0 : index
    %c0_14 = arith.constant 0 : index
    %14 = vector.load %arg7[%c0_13, %c0_14] : memref<1x128xf32, #tpu.memory_space<vmem>>, vector<1x128xf32>
    %15 = vector.broadcast %14 : vector<1x128xf32> to vector<256x128xf32>
    %16 = arith.addf %13, %15 : vector<256x128xf32>
    %cst_15 = arith.constant 0.000000e+00 : f32
    %17 = vector.broadcast %cst_15 : f32 to vector<256x128xf32>
    %18 = arith.maximumf %16, %17 : vector<256x128xf32>
    %19 = arith.truncf %18 : vector<256x128xf32> to vector<256x128xbf16>
    %c0_16 = arith.constant 0 : index
    %c0_17 = arith.constant 0 : index
    %20 = vector.load %arg8[%c0_16, %c0_17] : memref<128x4xbf16, #tpu.memory_space<vmem>>, vector<128x4xbf16>
    %cst_18 = arith.constant dense<0.000000e+00> : vector<256x4xf32>
    %21 = tpu.matmul %19, %20, %cst_18 {dimension_numbers = #tpu.dot_dimension_numbers<[1], [0], [0], [1], [0, 0, 1, 1], [], []>} : vector<256x128xbf16>, vector<128x4xbf16>, vector<256x4xf32> -> vector<256x4xf32>
    %c0_19 = arith.constant 0 : index
    %c0_20 = arith.constant 0 : index
    %22 = vector.load %arg10[%c0_19, %c0_20] : memref<1x4xf32, #tpu.memory_space<vmem>>, vector<1x4xf32>
    %23 = vector.broadcast %22 : vector<1x4xf32> to vector<256x4xf32>
    %24 = arith.addf %21, %23 : vector<256x4xf32>
    %25 = arith.addf %0, %24 : vector<256x4xf32>
    %c0_21 = arith.constant 0 : index
    %c0_22 = arith.constant 0 : index
    %26 = vector.load %arg12[%c0_21, %c0_22] : memref<256x4xf32, #tpu.memory_space<vmem>>, vector<256x4xf32>
    tpu.vector_store %arg12[%c0_21, %c0_22], %25 {strides = array<i32>} : memref<256x4xf32, #tpu.memory_space<vmem>>, vector<256x4xf32>,
    %c0_23 = arith.constant 0 : index
    %c0_24 = arith.constant 0 : index
    %27 = vector.load %arg9[%c0_23, %c0_24] : memref<128x4xbf16, #tpu.memory_space<vmem>>, vector<128x4xbf16>
    %cst_25 = arith.constant dense<0.000000e+00> : vector<256x4xf32>
    %28 = tpu.matmul %19, %27, %cst_25 {dimension_numbers = #tpu.dot_dimension_numbers<[1], [0], [0], [1], [0, 0, 1, 1], [], []>} : vector<256x128xbf16>, vector<128x4xbf16>, vector<256x4xf32> -> vector<256x4xf32>
    %c0_26 = arith.constant 0 : index
    %c0_27 = arith.constant 0 : index
    %29 = vector.load %arg11[%c0_26, %c0_27] : memref<1x4xf32, #tpu.memory_space<vmem>>, vector<1x4xf32>
    %30 = vector.broadcast %29 : vector<1x4xf32> to vector<256x4xf32>
    %31 = arith.addf %28, %30 : vector<256x4xf32>
    %32 = arith.addf %1, %31 : vector<256x4xf32>
    %c0_28 = arith.constant 0 : index
    %c0_29 = arith.constant 0 : index
    %33 = vector.load %arg13[%c0_28, %c0_29] : memref<256x4xf32, #tpu.memory_space<vmem>>, vector<256x4xf32>
    tpu.vector_store %arg13[%c0_28, %c0_29], %32 {strides = array<i32>} : memref<256x4xf32, #tpu.memory_space<vmem>>, vector<256x4xf32>,
    return
  }
  func.func @transform_0(%arg0: i32) -> (i32, i32) {
    %c0_i32 = arith.constant 0 : i32
    %c0_i32_0 = arith.constant 0 : i32
    return %arg0, %c0_i32 : i32, i32
  }
  func.func @transform_1(%arg0: i32) -> (i32, i32) {
    %c0_i32 = arith.constant 0 : i32
    %c0_i32_0 = arith.constant 0 : i32
    return %arg0, %c0_i32 : i32, i32
  }
  func.func @transform_2(%arg0: i32) -> (i32, i32) {
    %c0_i32 = arith.constant 0 : i32
    %c0_i32_0 = arith.constant 0 : i32
    return %arg0, %c0_i32 : i32, i32
  }
  func.func @transform_3(%arg0: i32) -> (i32, i32) {
    %c0_i32 = arith.constant 0 : i32
    %c0_i32_0 = arith.constant 0 : i32
    %c0_i32_1 = arith.constant 0 : i32
    return %c0_i32, %c0_i32_0 : i32, i32
  }
  func.func @transform_4(%arg0: i32) -> (i32, i32) {
    %c0_i32 = arith.constant 0 : i32
    %c0_i32_0 = arith.constant 0 : i32
    %c0_i32_1 = arith.constant 0 : i32
    return %c0_i32, %c0_i32_0 : i32, i32
  }
  func.func @transform_5(%arg0: i32) -> (i32, i32) {
    %c0_i32 = arith.constant 0 : i32
    %c0_i32_0 = arith.constant 0 : i32
    %c0_i32_1 = arith.constant 0 : i32
    return %c0_i32, %c0_i32_0 : i32, i32
  }
  func.func @transform_6(%arg0: i32) -> (i32, i32) {
    %c0_i32 = arith.constant 0 : i32
    %c0_i32_0 = arith.constant 0 : i32
    %c0_i32_1 = arith.constant 0 : i32
    return %c0_i32, %c0_i32_0 : i32, i32
  }
  func.func @transform_7(%arg0: i32) -> (i32, i32) {
    %c0_i32 = arith.constant 0 : i32
    %c0_i32_0 = arith.constant 0 : i32
    %c0_i32_1 = arith.constant 0 : i32
    return %c0_i32, %c0_i32_0 : i32, i32
  }
  func.func @transform_8(%arg0: i32) -> (i32, i32) {
    %c0_i32 = arith.constant 0 : i32
    %c0_i32_0 = arith.constant 0 : i32
    %c0_i32_1 = arith.constant 0 : i32
    return %c0_i32, %c0_i32_0 : i32, i32
  }
  func.func @transform_9(%arg0: i32) -> (i32, i32) {
    %c0_i32 = arith.constant 0 : i32
    %c0_i32_0 = arith.constant 0 : i32
    %c0_i32_1 = arith.constant 0 : i32
    return %c0_i32, %c0_i32_0 : i32, i32
  }
  func.func @transform_10(%arg0: i32) -> (i32, i32) {
    %c0_i32 = arith.constant 0 : i32
    %c0_i32_0 = arith.constant 0 : i32
    %c0_i32_1 = arith.constant 0 : i32
    return %c0_i32, %c0_i32_0 : i32, i32
  }
  func.func @transform_11(%arg0: i32) -> (i32, i32) {
    %c0_i32 = arith.constant 0 : i32
    %c0_i32_0 = arith.constant 0 : i32
    return %arg0, %c0_i32 : i32, i32
  }
  func.func @transform_12(%arg0: i32) -> (i32, i32) {
    %c0_i32 = arith.constant 0 : i32
    %c0_i32_0 = arith.constant 0 : i32
    return %arg0, %c0_i32 : i32, i32
  }
}

</mosaic_0001>

<llo_original>
// kernel: mujoco_dynamics_forward.1
$region0: #{mujoco_dynamics_forward.1}
  #allocation0 [shape = 'u32[]', space=smem, size = 0x4, offset = 0x4, fixed_abs, tag = 'smem constant byte address 0x4 - core index']
  #allocation1 [shape = 'u32[144,128]{1,0:T(1,128)}', space=vmem, size = 0x12000, scoped, tag = 'internal scratch']
  %s0 = inlined_call_operand.vmem [shape: f32[256,4], index: 0, kind: input, shape index: {}]
  %s1 = inlined_call_operand.vmem [shape: f32[256,4], index: 1, kind: input, shape index: {}]
  %s2 = inlined_call_operand.vmem [shape: f32[256,2], index: 2, kind: input, shape index: {}]
  %s3 = inlined_call_operand.vmem [shape: bf16[4,128], index: 3, kind: input, shape index: {}]
  %s4 = inlined_call_operand.vmem [shape: bf16[4,128], index: 4, kind: input, shape index: {}]
  %s5 = inlined_call_operand.vmem [shape: bf16[2,128], index: 5, kind: input, shape index: {}]
  %s6 = inlined_call_operand.vmem [shape: f32[1,128], index: 6, kind: input, shape index: {}]
  %s7 = inlined_call_operand.vmem [shape: bf16[128,4], index: 7, kind: input, shape index: {}]
  %s8 = inlined_call_operand.vmem [shape: bf16[128,4], index: 8, kind: input, shape index: {}]
  %s9 = inlined_call_operand.vmem [shape: f32[1,4], index: 9, kind: input, shape index: {}]
  %s10 = inlined_call_operand.vmem [shape: f32[1,4], index: 10, kind: input, shape index: {}]
  %s11 = inlined_call_operand.vmem [shape: f32[256,4], index: 11, kind: output, shape index: {0}]
  %s12 = inlined_call_operand.vmem [shape: f32[256,4], index: 12, kind: output, shape index: {1}]
  %13 = xla_tuple %s11, %s12
  %s14 = sld [smem:[#allocation0]]
  $region62: #{mujoco_dynamics_forward.1} parent=0
    _
  %s16 = ssub.s32 1, %s14
  %s17 = scalar_select 0, %s16, %s14
  // Predicated region
  $region2: #{mujoco_dynamics_forward.1} parent=0 // pred_check
    _
  $region3: #{mujoco_dynamics_forward.1} parent=0 // pred_check_branch
    %19 = sbr.rel (0) target = $region5
  $region4: #{mujoco_dynamics_forward.1} parent=0 // pred_region
    _
  $region5: #{mujoco_dynamics_forward.1} parent=0 // pred_fallthru
    _
  // Predicated region
  $region6: #{mujoco_dynamics_forward.1} parent=0 // pred_check
    _
  $region7: #{mujoco_dynamics_forward.1} parent=0 // pred_check_branch
    %21 = sbr.rel (0) target = $region9
  $region8: #{mujoco_dynamics_forward.1} parent=0 // pred_region
    _
  $region9: #{mujoco_dynamics_forward.1} parent=0 // pred_fallthru
    _
  // Predicated region
  $region10: #{mujoco_dynamics_forward.1} parent=0 // pred_check
    _
  $region11: #{mujoco_dynamics_forward.1} parent=0 // pred_check_branch
    %23 = sbr.rel (0) target = $region13
  $region12: #{mujoco_dynamics_forward.1} parent=0 // pred_region
    _
  $region13: #{mujoco_dynamics_forward.1} parent=0 // pred_fallthru
    _
  // Predicated region
  $region14: #{mujoco_dynamics_forward.1} parent=0 // pred_check
    _
  $region15: #{mujoco_dynamics_forward.1} parent=0 // pred_check_branch
    %25 = sbr.rel (0) target = $region17
  $region16: #{mujoco_dynamics_forward.1} parent=0 // pred_region
    _
  $region17: #{mujoco_dynamics_forward.1} parent=0 // pred_fallthru
    _
  // Predicated region
  $region18: #{mujoco_dynamics_forward.1} parent=0 // pred_check
    _
  $region19: #{mujoco_dynamics_forward.1} parent=0 // pred_check_branch
    %27 = sbr.rel (0) target = $region21
  $region20: #{mujoco_dynamics_forward.1} parent=0 // pred_region
    _
  $region21: #{mujoco_dynamics_forward.1} parent=0 // pred_fallthru
    _
  // Predicated region
  $region22: #{mujoco_dynamics_forward.1} parent=0 // pred_check
    _
  $region23: #{mujoco_dynamics_forward.1} parent=0 // pred_check_branch
    %29 = sbr.rel (0) target = $region25
  $region24: #{mujoco_dynamics_forward.1} parent=0 // pred_region
    _
  $region25: #{mujoco_dynamics_forward.1} parent=0 // pred_fallthru
    _
  // Predicated region
  $region26: #{mujoco_dynamics_forward.1} parent=0 // pred_check
    _
  $region27: #{mujoco_dynamics_forward.1} parent=0 // pred_check_branch
    %31 = sbr.rel (0) target = $region29
  $region28: #{mujoco_dynamics_forward.1} parent=0 // pred_region
    _
  $region29: #{mujoco_dynamics_forward.1} parent=0 // pred_fallthru
    _
  // Predicated region
  $region30: #{mujoco_dynamics_forward.1} parent=0 // pred_check
    _
  $region31: #{mujoco_dynamics_forward.1} parent=0 // pred_check_branch
    %33 = sbr.rel (0) target = $region33
  $region32: #{mujoco_dynamics_forward.1} parent=0 // pred_region
    _
  $region33: #{mujoco_dynamics_forward.1} parent=0 // pred_fallthru
    _
  // Predicated region
  $region34: #{mujoco_dynamics_forward.1} parent=0 // pred_check
    _
  $region35: #{mujoco_dynamics_forward.1} parent=0 // pred_check_branch
    %35 = sbr.rel (0) target = $region37
  $region36: #{mujoco_dynamics_forward.1} parent=0 // pred_region
    _
  $region37: #{mujoco_dynamics_forward.1} parent=0 // pred_fallthru
    _
  // Predicated region
  $region38: #{mujoco_dynamics_forward.1} parent=0 // pred_check
    _
  $region39: #{mujoco_dynamics_forward.1} parent=0 // pred_check_branch
    %37 = sbr.rel (0) target = $region41
  $region40: #{mujoco_dynamics_forward.1} parent=0 // pred_region
    _
  $region41: #{mujoco_dynamics_forward.1} parent=0 // pred_fallthru
    _
  // Predicated region
  $region42: #{mujoco_dynamics_forward.1} parent=0 // pred_check
    _
  $region43: #{mujoco_dynamics_forward.1} parent=0 // pred_check_branch
    %39 = sbr.rel (0) target = $region45
  $region44: #{mujoco_dynamics_forward.1} parent=0 // pred_region
    _
  $region45: #{mujoco_dynamics_forward.1} parent=0 // pred_fallthru
    _
  %v41 = vld [vmem:[%s0] sm:$0xff]
  %v42 = vld [vmem:[%s0 + $0x8] sm:$0xff]
  %v43 = vld [vmem:[%s0 + $0x10] sm:$0xff]
  %v44 = vld [vmem:[%s0 + $0x18] sm:$0xff]
  %v45 = vld [vmem:[%s0 + $0x20] sm:$0xff]
  %v46 = vld [vmem:[%s0 + $0x28] sm:$0xff]
  %v47 = vld [vmem:[%s0 + $0x30] sm:$0xff]
  %v48 = vld [vmem:[%s0 + $0x38] sm:$0xff]
  %v49 = vld [vmem:[%s0 + $0x40] sm:$0xff]
  %v50 = vld [vmem:[%s0 + $0x48] sm:$0xff]
  %v51 = vld [vmem:[%s0 + $0x50] sm:$0xff]
  %v52 = vld [vmem:[%s0 + $0x58] sm:$0xff]
  %v53 = vld [vmem:[%s0 + $0x60] sm:$0xff]
  %v54 = vld [vmem:[%s0 + $0x68] sm:$0xff]
  %v55 = vld [vmem:[%s0 + $0x70] sm:$0xff]
  %v56 = vld [vmem:[%s0 + $0x78] sm:$0xff]
  %v57 = vld [vmem:[%s0 + $0x80] sm:$0xff]
  %v58 = vld [vmem:[%s0 + $0x88] sm:$0xff]
  %v59 = vld [vmem:[%s0 + $0x90] sm:$0xff]
  %v60 = vld [vmem:[%s0 + $0x98] sm:$0xff]
  %v61 = vld [vmem:[%s0 + $0xa0] sm:$0xff]
  %v62 = vld [vmem:[%s0 + $0xa8] sm:$0xff]
  %v63 = vld [vmem:[%s0 + $0xb0] sm:$0xff]
  %v64 = vld [vmem:[%s0 + $0xb8] sm:$0xff]
  %v65 = vld [vmem:[%s0 + $0xc0] sm:$0xff]
  %v66 = vld [vmem:[%s0 + $0xc8] sm:$0xff]
  %v67 = vld [vmem:[%s0 + $0xd0] sm:$0xff]
  %v68 = vld [vmem:[%s0 + $0xd8] sm:$0xff]
  %v69 = vld [vmem:[%s0 + $0xe0] sm:$0xff]
  %v70 = vld [vmem:[%s0 + $0xe8] sm:$0xff]
  %v71 = vld [vmem:[%s0 + $0xf0] sm:$0xff]
  %v72 = vld [vmem:[%s0 + $0xf8] sm:$0xff]
  %v73 = vld [vmem:[%s1] sm:$0xff]
  %v74 = vld [vmem:[%s1 + $0x8] sm:$0xff]
  %v75 = vld [vmem:[%s1 + $0x10] sm:$0xff]
  %v76 = vld [vmem:[%s1 + $0x18] sm:$0xff]
  %v77 = vld [vmem:[%s1 + $0x20] sm:$0xff]
  %v78 = vld [vmem:[%s1 + $0x28] sm:$0xff]
  %v79 = vld [vmem:[%s1 + $0x30] sm:$0xff]
  %v80 = vld [vmem:[%s1 + $0x38] sm:$0xff]
  %v81 = vld [vmem:[%s1 + $0x40] sm:$0xff]
  %v82 = vld [vmem:[%s1 + $0x48] sm:$0xff]
  %v83 = vld [vmem:[%s1 + $0x50] sm:$0xff]
  %v84 = vld [vmem:[%s1 + $0x58] sm:$0xff]
  %v85 = vld [vmem:[%s1 + $0x60] sm:$0xff]
  %v86 = vld [vmem:[%s1 + $0x68] sm:$0xff]
  %v87 = vld [vmem:[%s1 + $0x70] sm:$0xff]
  %v88 = vld [vmem:[%s1 + $0x78] sm:$0xff]
  %v89 = vld [vmem:[%s1 + $0x80] sm:$0xff]
  %v90 = vld [vmem:[%s1 + $0x88] sm:$0xff]
  %v91 = vld [vmem:[%s1 + $0x90] sm:$0xff]
  %v92 = vld [vmem:[%s1 + $0x98] sm:$0xff]
  %v93 = vld [vmem:[%s1 + $0xa0] sm:$0xff]
  %v94 = vld [vmem:[%s1 + $0xa8] sm:$0xff]
  %v95 = vld [vmem:[%s1 + $0xb0] sm:$0xff]
  %v96 = vld [vmem:[%s1 + $0xb8] sm:$0xff]
  %v97 = vld [vmem:[%s1 + $0xc0] sm:$0xff]
  %v98 = vld [vmem:[%s1 + $0xc8] sm:$0xff]
  %v99 = vld [vmem:[%s1 + $0xd0] sm:$0xff]
  %v100 = vld [vmem:[%s1 + $0xd8] sm:$0xff]
  %v101 = vld [vmem:[%s1 + $0xe0] sm:$0xff]
  %v102 = vld [vmem:[%s1 + $0xe8] sm:$0xff]
  %v103 = vld [vmem:[%s1 + $0xf0] sm:$0xff]
  %v104 = vld [vmem:[%s1 + $0xf8] sm:$0xff]
  %v105 = vld [vmem:[%s2] sm:$0xff]
  %v106 = vld [vmem:[%s2 + $0x8] sm:$0xff]
  %v107 = vld [vmem:[%s2 + $0x10] sm:$0xff]
  %v108 = vld [vmem:[%s2 + $0x18] sm:$0xff]
  %v109 = vld [vmem:[%s2 + $0x20] sm:$0xff]
  %v110 = vld [vmem:[%s2 + $0x28] sm:$0xff]
  %v111 = vld [vmem:[%s2 + $0x30] sm:$0xff]
  %v112 = vld [vmem:[%s2 + $0x38] sm:$0xff]
  %v113 = vld [vmem:[%s2 + $0x40] sm:$0xff]
  %v114 = vld [vmem:[%s2 + $0x48] sm:$0xff]
  %v115 = vld [vmem:[%s2 + $0x50] sm:$0xff]
  %v116 = vld [vmem:[%s2 + $0x58] sm:$0xff]
  %v117 = vld [vmem:[%s2 + $0x60] sm:$0xff]
  %v118 = vld [vmem:[%s2 + $0x68] sm:$0xff]
  %v119 = vld [vmem:[%s2 + $0x70] sm:$0xff]
  %v120 = vld [vmem:[%s2 + $0x78] sm:$0xff]
  %v121 = vld [vmem:[%s2 + $0x80] sm:$0xff]
  %v122 = vld [vmem:[%s2 + $0x88] sm:$0xff]
  %v123 = vld [vmem:[%s2 + $0x90] sm:$0xff]
  %v124 = vld [vmem:[%s2 + $0x98] sm:$0xff]
  %v125 = vld [vmem:[%s2 + $0xa0] sm:$0xff]
  %v126 = vld [vmem:[%s2 + $0xa8] sm:$0xff]
  %v127 = vld [vmem:[%s2 + $0xb0] sm:$0xff]
  %v128 = vld [vmem:[%s2 + $0xb8] sm:$0xff]
  %v129 = vld [vmem:[%s2 + $0xc0] sm:$0xff]
  %v130 = vld [vmem:[%s2 + $0xc8] sm:$0xff]
  %v131 = vld [vmem:[%s2 + $0xd0] sm:$0xff]
  %v132 = vld [vmem:[%s2 + $0xd8] sm:$0xff]
  %v133 = vld [vmem:[%s2 + $0xe0] sm:$0xff]
  %v134 = vld [vmem:[%s2 + $0xe8] sm:$0xff]
  %v135 = vld [vmem:[%s2 + $0xf0] sm:$0xff]
  %v136 = vld [vmem:[%s2 + $0xf8] sm:$0xff]
  %v137 = vpack.c.bf16 %v42, %v41
  %v138 = vpack.c.bf16 %v44, %v43
  %v139 = vpack.c.bf16 %v46, %v45
  %v140 = vpack.c.bf16 %v48, %v47
  %v141 = vpack.c.bf16 %v50, %v49
  %v142 = vpack.c.bf16 %v52, %v51
  %v143 = vpack.c.bf16 %v54, %v53
  %v144 = vpack.c.bf16 %v56, %v55
  %v145 = vpack.c.bf16 %v58, %v57
  %v146 = vpack.c.bf16 %v60, %v59
  %v147 = vpack.c.bf16 %v62, %v61
  %v148 = vpack.c.bf16 %v64, %v63
  %v149 = vpack.c.bf16 %v66, %v65
  %v150 = vpack.c.bf16 %v68, %v67
  %v151 = vpack.c.bf16 %v70, %v69
  %v152 = vpack.c.bf16 %v72, %v71
  %v153 = vld [vmem:[%s3] sm:$0x3]
  %v154 = vpack.c.bf16 %v74, %v73
  %v155 = vpack.c.bf16 %v76, %v75
  %v156 = vpack.c.bf16 %v78, %v77
  %v157 = vpack.c.bf16 %v80, %v79
  %v158 = vpack.c.bf16 %v82, %v81
  %v159 = vpack.c.bf16 %v84, %v83
  %v160 = vpack.c.bf16 %v86, %v85
  %v161 = vpack.c.bf16 %v88, %v87
  %v162 = vpack.c.bf16 %v90, %v89
  %v163 = vpack.c.bf16 %v92, %v91
  %v164 = vpack.c.bf16 %v94, %v93
  %v165 = vpack.c.bf16 %v96, %v95
  %v166 = vpack.c.bf16 %v98, %v97
  %v167 = vpack.c.bf16 %v100, %v99
  %v168 = vpack.c.bf16 %v102, %v101
  %v169 = vpack.c.bf16 %v104, %v103
  %v170 = vld [vmem:[%s4] sm:$0x3]
  %vm171 = vcmask 31744
  %v173 = vsel %vm171, %v154, 0
  %v176 = vsel %vm171, %v155, 0
  %v179 = vsel %vm171, %v156, 0
  %v182 = vsel %vm171, %v157, 0
  %v185 = vsel %vm171, %v158, 0
  %v188 = vsel %vm171, %v159, 0
  %v191 = vsel %vm171, %v160, 0
  %v194 = vsel %vm171, %v161, 0
  %v197 = vsel %vm171, %v162, 0
  %v200 = vsel %vm171, %v163, 0
  %v203 = vsel %vm171, %v164, 0
  %v206 = vsel %vm171, %v165, 0
  %v209 = vsel %vm171, %v166, 0
  %v212 = vsel %vm171, %v167, 0
  %v215 = vsel %vm171, %v168, 0
  %v218 = vsel %vm171, %v169, 0
  %vm220 = vcmask 1041408
  %v222 = vsel %vm220, %v170, 0
  %224 = vmatprep.subr.bf16.mxu0 0
  %225 = vmatpush1.bf16.msra.mxu0 %v222
  %226 = vmatprep.subr.bf16.mxu0 0
  %227 = vmatpush1.bf16.msra.mxu0 0
  %228 = vmatprep.subr.bf16.mxu0 0
  %229 = vmatpush1.bf16.msra.mxu0 0
  %230 = vmatprep.subr.bf16.mxu0 0
  %231 = vmatpush1.bf16.msra.mxu0 0
  %232 = vmatprep.subr.bf16.mxu0 0
  %233 = vmatpush1.bf16.msra.mxu0 0
  %234 = vmatprep.subr.bf16.mxu0 0
  %235 = vmatpush1.bf16.msra.mxu0 0
  %236 = vmatprep.subr.bf16.mxu0 0
  %237 = vmatpush1.bf16.msra.mxu0 0
  %238 = vmatprep.subr.bf16.mxu0 0
  %239 = vmatpush1.bf16.msra.mxu0 0
  %240 = vmatprep.subr.bf16.mxu0 0
  %241 = vmatpush1.bf16.msra.mxu0 0
  %242 = vmatprep.subr.bf16.mxu0 0
  %243 = vmatpush1.bf16.msra.mxu0 0
  %244 = vmatprep.subr.bf16.mxu0 0
  %245 = vmatpush1.bf16.msra.mxu0 0
  %246 = vmatprep.subr.bf16.mxu0 0
  %247 = vmatpush1.bf16.msra.mxu0 0
  %248 = vmatprep.subr.bf16.mxu0 0
  %249 = vmatpush1.bf16.msra.mxu0 0
  %250 = vmatprep.subr.bf16.mxu0 0
  %251 = vmatpush1.bf16.msra.mxu0 0
  %252 = vmatprep.subr.bf16.mxu0 0
  %253 = vmatpush1.bf16.msra.mxu0 0
  %254 = vmatprep.subr.bf16.mxu0 0
  %255 = vmatpush1.bf16.msra.mxu0 0
  %256 = vmatprep.mubr.bf16.mxu0 0
  %257 = vmatmul.mubr.bf16.gmra.mrb[0].mxu0 %v173
  %v258 = vpop.f32.mrb[0].mxu0
  %v259 = vadd.f32 0.0, %v258
  %v260 = vpop.f32.mrb[0].mxu0
  %v261 = vpop.f32.mrb[0].mxu0
  %v262 = vadd.f32 0.0, %v261
  %v263 = vpop.f32.mrb[0].mxu0
  %264 = vmatprep.mubr.bf16.mxu0 0
  %265 = vmatmul.mubr.bf16.gmra.mrb[0].mxu0 %v176
  %v266 = vpop.f32.mrb[0].mxu0
  %v267 = vadd.f32 0.0, %v266
  %v268 = vpop.f32.mrb[0].mxu0
  %v269 = vpop.f32.mrb[0].mxu0
  %v270 = vadd.f32 0.0, %v269
  %v271 = vpop.f32.mrb[0].mxu0
  %272 = vmatprep.mubr.bf16.mxu0 0
  %273 = vmatmul.mubr.bf16.gmra.mrb[0].mxu0 %v179
  %v274 = vpop.f32.mrb[0].mxu0
  %v275 = vadd.f32 0.0, %v274
  %v276 = vpop.f32.mrb[0].mxu0
  %v277 = vpop.f32.mrb[0].mxu0
  %v278 = vadd.f32 0.0, %v277
  %v279 = vpop.f32.mrb[0].mxu0
  %280 = vmatprep.mubr.bf16.mxu0 0
  %281 = vmatmul.mubr.bf16.gmra.mrb[0].mxu0 %v182
  %v282 = vpop.f32.mrb[0].mxu0
  %v283 = vadd.f32 0.0, %v282
  %v284 = vpop.f32.mrb[0].mxu0
  %v285 = vpop.f32.mrb[0].mxu0
  %v286 = vadd.f32 0.0, %v285
  %v287 = vpop.f32.mrb[0].mxu0
  %288 = vmatprep.mubr.bf16.mxu0 0
  %289 = vmatmul.mubr.bf16.gmra.mrb[0].mxu0 %v185
  %v290 = vpop.f32.mrb[0].mxu0
  %v291 = vadd.f32 0.0, %v290
  %v292 = vpop.f32.mrb[0].mxu0
  %v293 = vpop.f32.mrb[0].mxu0
  %v294 = vadd.f32 0.0, %v293
  %v295 = vpop.f32.mrb[0].mxu0
  %296 = vmatprep.mubr.bf16.mxu0 0
  %297 = vmatmul.mubr.bf16.gmra.mrb[0].mxu0 %v188
  %v298 = vpop.f32.mrb[0].mxu0
  %v299 = vadd.f32 0.0, %v298
  %v300 = vpop.f32.mrb[0].mxu0
  %v301 = vpop.f32.mrb[0].mxu0
  %v302 = vadd.f32 0.0, %v301
  %v303 = vpop.f32.mrb[0].mxu0
  %304 = vmatprep.mubr.bf16.mxu0 0
  %305 = vmatmul.mubr.bf16.gmra.mrb[0].mxu0 %v191
  %v306 = vpop.f32.mrb[0].mxu0
  %v307 = vadd.f32 0.0, %v306
  %v308 = vpop.f32.mrb[0].mxu0
  %v309 = vpop.f32.mrb[0].mxu0
  %v310 = vadd.f32 0.0, %v309
  %v311 = vpop.f32.mrb[0].mxu0
  %312 = vmatprep.mubr.bf16.mxu0 0
  %313 = vmatmul.mubr.bf16.gmra.mrb[0].mxu0 %v194
  %v314 = vpop.f32.mrb[0].mxu0
  %v315 = vadd.f32 0.0, %v314
  %v316 = vpop.f32.mrb[0].mxu0
  %v317 = vpop.f32.mrb[0].mxu0
  %v318 = vadd.f32 0.0, %v317
  %v319 = vpop.f32.mrb[0].mxu0
  %320 = vmatprep.mubr.bf16.mxu0 0
  %321 = vmatmul.mubr.bf16.gmra.mrb[0].mxu0 %v197
  %v322 = vpop.f32.mrb[0].mxu0
  %v323 = vadd.f32 0.0, %v322
  %v324 = vpop.f32.mrb[0].mxu0
  %v325 = vpop.f32.mrb[0].mxu0
  %v326 = vadd.f32 0.0, %v325
  %v327 = vpop.f32.mrb[0].mxu0
  %328 = vmatprep.mubr.bf16.mxu0 0
  %329 = vmatmul.mubr.bf16.gmra.mrb[0].mxu0 %v200
  %v330 = vpop.f32.mrb[0].mxu0
  %v331 = vadd.f32 0.0, %v330
  %v332 = vpop.f32.mrb[0].mxu0
  %v333 = vpop.f32.mrb[0].mxu0
  %v334 = vadd.f32 0.0, %v333
  %v335 = vpop.f32.mrb[0].mxu0
  %336 = vmatprep.mubr.bf16.mxu0 0
  %337 = vmatmul.mubr.bf16.gmra.mrb[0].mxu0 %v203
  %v338 = vpop.f32.mrb[0].mxu0
  %v339 = vadd.f32 0.0, %v338
  %v340 = vpop.f32.mrb[0].mxu0
  %v341 = vpop.f32.mrb[0].mxu0
  %v342 = vadd.f32 0.0, %v341
  %v343 = vpop.f32.mrb[0].mxu0
  %344 = vmatprep.mubr.bf16.mxu0 0
  %345 = vmatmul.mubr.bf16.gmra.mrb[0].mxu0 %v206
  %v346 = vpop.f32.mrb[0].mxu0
  %v347 = vadd.f32 0.0, %v346
  %v348 = vpop.f32.mrb[0].mxu0
  %v349 = vpop.f32.mrb[0].mxu0
  %v350 = vadd.f32 0.0, %v349
  %v351 = vpop.f32.mrb[0].mxu0
  %352 = vmatprep.mubr.bf16.mxu0 0
  %353 = vmatmul.mubr.bf16.gmra.mrb[0].mxu0 %v209
  %v354 = vpop.f32.mrb[0].mxu0
  %v355 = vadd.f32 0.0, %v354
  %v356 = vpop.f32.mrb[0].mxu0
  %v357 = vpop.f32.mrb[0].mxu0
  %v358 = vadd.f32 0.0, %v357
  %v359 = vpop.f32.mrb[0].mxu0
  %360 = vmatprep.mubr.bf16.mxu0 0
  %361 = vmatmul.mubr.bf16.gmra.mrb[0].mxu0 %v212
  %v362 = vpop.f32.mrb[0].mxu0
  %v363 = vadd.f32 0.0, %v362
  %v364 = vpop.f32.mrb[0].mxu0
  %v365 = vpop.f32.mrb[0].mxu0
  %v366 = vadd.f32 0.0, %v365
  %v367 = vpop.f32.mrb[0].mxu0
  %368 = vmatprep.mubr.bf16.mxu0 0
  %369 = vmatmul.mubr.bf16.gmra.mrb[0].mxu0 %v215
  %v370 = vpop.f32.mrb[0].mxu0
  %v371 = vadd.f32 0.0, %v370
  %v372 = vpop.f32.mrb[0].mxu0
  %v373 = vpop.f32.mrb[0].mxu0
  %v374 = vadd.f32 0.0, %v373
  %v375 = vpop.f32.mrb[0].mxu0
  %376 = vmatprep.mubr.bf16.mxu0 0
  %377 = vmatmul.mubr.bf16.gmra.mrb[0].mxu0 %v218
  %v378 = vpop.f32.mrb[0].mxu0
  %v379 = vadd.f32 0.0, %v378
  %v380 = vpop.f32.mrb[0].mxu0
  %v381 = vpop.f32.mrb[0].mxu0
  %v382 = vadd.f32 0.0, %v381
  %v383 = vpop.f32.mrb[0].mxu0
  %384 = vdwg.mxu0
  %v386 = vsel %vm171, %v137, 0
  %v389 = vsel %vm171, %v138, 0
  %v392 = vsel %vm171, %v139, 0
  %v395 = vsel %vm171, %v140, 0
  %v398 = vsel %vm171, %v141, 0
  %v401 = vsel %vm171, %v142, 0
  %v404 = vsel %vm171, %v143, 0
  %v407 = vsel %vm171, %v144, 0
  %v410 = vsel %vm171, %v145, 0
  %v413 = vsel %vm171, %v146, 0
  %v416 = vsel %vm171, %v147, 0
  %v419 = vsel %vm171, %v148, 0
  %v422 = vsel %vm171, %v149, 0
  %v425 = vsel %vm171, %v150, 0
  %v428 = vsel %vm171, %v151, 0
  %v431 = vsel %vm171, %v152, 0
  %v434 = vsel %vm220, %v153, 0
  %436 = vmatprep.subr.bf16.mxu0 0
  %437 = vmatpush1.bf16.msra.mxu0 %v434
  %438 = vmatprep.subr.bf16.mxu0 0
  %439 = vmatpush1.bf16.msra.mxu0 0
  %440 = vmatprep.subr.bf16.mxu0 0
  %441 = vmatpush1.bf16.msra.mxu0 0
  %442 = vmatprep.subr.bf16.mxu0 0
  %443 = vmatpush1.bf16.msra.mxu0 0
  %444 = vmatprep.subr.bf16.mxu0 0
  %445 = vmatpush1.bf16.msra.mxu0 0
  %446 = vmatprep.subr.bf16.mxu0 0
  %447 = vmatpush1.bf16.msra.mxu0 0
  %448 = vmatprep.subr.bf16.mxu0 0
  %449 = vmatpush1.bf16.msra.mxu0 0
  %450 = vmatprep.subr.bf16.mxu0 0
  %451 = vmatpush1.bf16.msra.mxu0 0
  %452 = vmatprep.subr.bf16.mxu0 0
  %453 = vmatpush1.bf16.msra.mxu0 0
  %454 = vmatprep.subr.bf16.mxu0 0
  %455 = vmatpush1.bf16.msra.mxu0 0
  %456 = vmatprep.subr.bf16.mxu0 0
  %457 = vmatpush1.bf16.msra.mxu0 0
  %458 = vmatprep.subr.bf16.mxu0 0
  %459 = vmatpush1.bf16.msra.mxu0 0
  %460 = vmatprep.subr.bf16.mxu0 0
  %461 = vmatpush1.bf16.msra.mxu0 0
  %462 = vmatprep.subr.bf16.mxu0 0
  %463 = vmatpush1.bf16.msra.mxu0 0
  %464 = vmatprep.subr.bf16.mxu0 0
  %465 = vmatpush1.bf16.msra.mxu0 0
  %466 = vmatprep.subr.bf16.mxu0 0
  %467 = vmatpush1.bf16.msra.mxu0 0
  %468 = vmatprep.mubr.bf16.mxu0 0
  %469 = vmatmul.mubr.bf16.gmra.mrb[0].mxu0 %v386
  %v470 = vpop.f32.mrb[0].mxu0
  %v471 = vadd.f32 %v259, %v470
  %v472 = vpop.f32.mrb[0].mxu0
  %v473 = vpop.f32.mrb[0].mxu0
  %v474 = vadd.f32 %v262, %v473
  %v475 = vpop.f32.mrb[0].mxu0
  %476 = vmatprep.mubr.bf16.mxu0 0
  %477 = vmatmul.mubr.bf16.gmra.mrb[0].mxu0 %v389
  %v478 = vpop.f32.mrb[0].mxu0
  %v479 = vadd.f32 %v267, %v478
  %v480 = vpop.f32.mrb[0].mxu0
  %v481 = vpop.f32.mrb[0].mxu0
  %v482 = vadd.f32 %v270, %v481
  %v483 = vpop.f32.mrb[0].mxu0
  %484 = vmatprep.mubr.bf16.mxu0 0
  %485 = vmatmul.mubr.bf16.gmra.mrb[0].mxu0 %v392
  %v486 = vpop.f32.mrb[0].mxu0
  %v487 = vadd.f32 %v275, %v486
  %v488 = vpop.f32.mrb[0].mxu0
  %v489 = vpop.f32.mrb[0].mxu0
  %v490 = vadd.f32 %v278, %v489
  %v491 = vpop.f32.mrb[0].mxu0
  %492 = vmatprep.mubr.bf16.mxu0 0
  %493 = vmatmul.mubr.bf16.gmra.mrb[0].mxu0 %v395
  %v494 = vpop.f32.mrb[0].mxu0
  %v495 = vadd.f32 %v283, %v494
  %v496 = vpop.f32.mrb[0].mxu0
  %v497 = vpop.f32.mrb[0].mxu0
  %v498 = vadd.f32 %v286, %v497
  %v499 = vpop.f32.mrb[0].mxu0
  %500 = vmatprep.mubr.bf16.mxu0 0
  %501 = vmatmul.mubr.bf16.gmra.mrb[0].mxu0 %v398
  %v502 = vpop.f32.mrb[0].mxu0
  %v503 = vadd.f32 %v291, %v502
  %v504 = vpop.f32.mrb[0].mxu0
  %v505 = vpop.f32.mrb[0].mxu0
  %v506 = vadd.f32 %v294, %v505
  %v507 = vpop.f32.mrb[0].mxu0
  %508 = vmatprep.mubr.bf16.mxu0 0
  %509 = vmatmul.mubr.bf16.gmra.mrb[0].mxu0 %v401
  %v510 = vpop.f32.mrb[0].mxu0
  %v511 = vadd.f32 %v299, %v510
  %v512 = vpop.f32.mrb[0].mxu0
  %v513 = vpop.f32.mrb[0].mxu0
  %v514 = vadd.f32 %v302, %v513
  %v515 = vpop.f32.mrb[0].mxu0
  %516 = vmatprep.mubr.bf16.mxu0 0
  %517 = vmatmul.mubr.bf16.gmra.mrb[0].mxu0 %v404
  %v518 = vpop.f32.mrb[0].mxu0
  %v519 = vadd.f32 %v307, %v518
  %v520 = vpop.f32.mrb[0].mxu0
  %v521 = vpop.f32.mrb[0].mxu0
  %v522 = vadd.f32 %v310, %v521
  %v523 = vpop.f32.mrb[0].mxu0
  %524 = vmatprep.mubr.bf16.mxu0 0
  %525 = vmatmul.mubr.bf16.gmra.mrb[0].mxu0 %v407
  %v526 = vpop.f32.mrb[0].mxu0
  %v527 = vadd.f32 %v315, %v526
  %v528 = vpop.f32.mrb[0].mxu0
  %v529 = vpop.f32.mrb[0].mxu0
  %v530 = vadd.f32 %v318, %v529
  %v531 = vpop.f32.mrb[0].mxu0
  %532 = vmatprep.mubr.bf16.mxu0 0
  %533 = vmatmul.mubr.bf16.gmra.mrb[0].mxu0 %v410
  %v534 = vpop.f32.mrb[0].mxu0
  %v535 = vadd.f32 %v323, %v534
  %v536 = vpop.f32.mrb[0].mxu0
  %v537 = vpop.f32.mrb[0].mxu0
  %v538 = vadd.f32 %v326, %v537
  %v539 = vpop.f32.mrb[0].mxu0
  %540 = vmatprep.mubr.bf16.mxu0 0
  %541 = vmatmul.mubr.bf16.gmra.mrb[0].mxu0 %v413
  %v542 = vpop.f32.mrb[0].mxu0
  %v543 = vadd.f32 %v331, %v542
  %v544 = vpop.f32.mrb[0].mxu0
  %v545 = vpop.f32.mrb[0].mxu0
  %v546 = vadd.f32 %v334, %v545
  %v547 = vpop.f32.mrb[0].mxu0
  %548 = vmatprep.mubr.bf16.mxu0 0
  %549 = vmatmul.mubr.bf16.gmra.mrb[0].mxu0 %v416
  %v550 = vpop.f32.mrb[0].mxu0
  %v551 = vadd.f32 %v339, %v550
  %v552 = vpop.f32.mrb[0].mxu0
  %v553 = vpop.f32.mrb[0].mxu0
  %v554 = vadd.f32 %v342, %v553
  %v555 = vpop.f32.mrb[0].mxu0
  %556 = vmatprep.mubr.bf16.mxu0 0
  %557 = vmatmul.mubr.bf16.gmra.mrb[0].mxu0 %v419
  %v558 = vpop.f32.mrb[0].mxu0
  %v559 = vadd.f32 %v347, %v558
  %v560 = vpop.f32.mrb[0].mxu0
  %v561 = vpop.f32.mrb[0].mxu0
  %v562 = vadd.f32 %v350, %v561
  %v563 = vpop.f32.mrb[0].mxu0
  %564 = vmatprep.mubr.bf16.mxu0 0
  %565 = vmatmul.mubr.bf16.gmra.mrb[0].mxu0 %v422
  %v566 = vpop.f32.mrb[0].mxu0
  %v567 = vadd.f32 %v355, %v566
  %v568 = vpop.f32.mrb[0].mxu0
  %v569 = vpop.f32.mrb[0].mxu0
  %v570 = vadd.f32 %v358, %v569
  %v571 = vpop.f32.mrb[0].mxu0
  %572 = vmatprep.mubr.bf16.mxu0 0
  %573 = vmatmul.mubr.bf16.gmra.mrb[0].mxu0 %v425
  %v574 = vpop.f32.mrb[0].mxu0
  %v575 = vadd.f32 %v363, %v574
  %v576 = vpop.f32.mrb[0].mxu0
  %v577 = vpop.f32.mrb[0].mxu0
  %v578 = vadd.f32 %v366, %v577
  %v579 = vpop.f32.mrb[0].mxu0
  %580 = vmatprep.mubr.bf16.mxu0 0
  %581 = vmatmul.mubr.bf16.gmra.mrb[0].mxu0 %v428
  %v582 = vpop.f32.mrb[0].mxu0
  %v583 = vadd.f32 %v371, %v582
  %v584 = vpop.f32.mrb[0].mxu0
  %v585 = vpop.f32.mrb[0].mxu0
  %v586 = vadd.f32 %v374, %v585
  %v587 = vpop.f32.mrb[0].mxu0
  %588 = vmatprep.mubr.bf16.mxu0 0
  %589 = vmatmul.mubr.bf16.gmra.mrb[0].mxu0 %v431
  %v590 = vpop.f32.mrb[0].mxu0
  %v591 = vadd.f32 %v379, %v590
  %v592 = vpop.f32.mrb[0].mxu0
  %v593 = vpop.f32.mrb[0].mxu0
  %v594 = vadd.f32 %v382, %v593
  %v595 = vpop.f32.mrb[0].mxu0
  %596 = vdwg.mxu0
  %v597 = vpack.c.bf16 %v106, %v105
  %v598 = vpack.c.bf16 %v108, %v107
  %v599 = vpack.c.bf16 %v110, %v109
  %v600 = vpack.c.bf16 %v112, %v111
  %v601 = vpack.c.bf16 %v114, %v113
  %v602 = vpack.c.bf16 %v116, %v115
  %v603 = vpack.c.bf16 %v118, %v117
  %v604 = vpack.c.bf16 %v120, %v119
  %v605 = vpack.c.bf16 %v122, %v121
  %v606 = vpack.c.bf16 %v124, %v123
  %v607 = vpack.c.bf16 %v126, %v125
  %v608 = vpack.c.bf16 %v128, %v127
  %v609 = vpack.c.bf16 %v130, %v129
  %v610 = vpack.c.bf16 %v132, %v131
  %v611 = vpack.c.bf16 %v134, %v133
  %v612 = vpack.c.bf16 %v136, %v135
  %v613 = vld [vmem:[%s5] sm:$0x1]
  %vm614 = vcmask 15360
  %v616 = vsel %vm614, %v597, 0
  %v619 = vsel %vm614, %v598, 0
  %v622 = vsel %vm614, %v599, 0
  %v625 = vsel %vm614, %v600, 0
  %v628 = vsel %vm614, %v601, 0
  %v631 = vsel %vm614, %v602, 0
  %v634 = vsel %vm614, %v603, 0
  %v637 = vsel %vm614, %v604, 0
  %v640 = vsel %vm614, %v605, 0
  %v643 = vsel %vm614, %v606, 0
  %v646 = vsel %vm614, %v607, 0
  %v649 = vsel %vm614, %v608, 0
  %v652 = vsel %vm614, %v609, 0
  %v655 = vsel %vm614, %v610, 0
  %v658 = vsel %vm614, %v611, 0
  %v661 = vsel %vm614, %v612, 0
  %vm663 = vcmask 1040384
  %v665 = vsel %vm663, %v613, 0
  %667 = vmatprep.subr.bf16.mxu0 0
  %668 = vmatpush1.bf16.msra.mxu0 %v665
  %669 = vmatprep.subr.bf16.mxu0 0
  %670 = vmatpush1.bf16.msra.mxu0 0
  %671 = vmatprep.subr.bf16.mxu0 0
  %672 = vmatpush1.bf16.msra.mxu0 0
  %673 = vmatprep.subr.bf16.mxu0 0
  %674 = vmatpush1.bf16.msra.mxu0 0
  %675 = vmatprep.subr.bf16.mxu0 0
  %676 = vmatpush1.bf16.msra.mxu0 0
  %677 = vmatprep.subr.bf16.mxu0 0
  %678 = vmatpush1.bf16.msra.mxu0 0
  %679 = vmatprep.subr.bf16.mxu0 0
  %680 = vmatpush1.bf16.msra.mxu0 0
  %681 = vmatprep.subr.bf16.mxu0 0
  %682 = vmatpush1.bf16.msra.mxu0 0
  %683 = vmatprep.subr.bf16.mxu0 0
  %684 = vmatpush1.bf16.msra.mxu0 0
  %685 = vmatprep.subr.bf16.mxu0 0
  %686 = vmatpush1.bf16.msra.mxu0 0
  %687 = vmatprep.subr.bf16.mxu0 0
  %688 = vmatpush1.bf16.msra.mxu0 0
  %689 = vmatprep.subr.bf16.mxu0 0
  %690 = vmatpush1.bf16.msra.mxu0 0
  %691 = vmatprep.subr.bf16.mxu0 0
  %692 = vmatpush1.bf16.msra.mxu0 0
  %693 = vmatprep.subr.bf16.mxu0 0
  %694 = vmatpush1.bf16.msra.mxu0 0
  %695 = vmatprep.subr.bf16.mxu0 0
  %696 = vmatpush1.bf16.msra.mxu0 0
  %697 = vmatprep.subr.bf16.mxu0 0
  %698 = vmatpush1.bf16.msra.mxu0 0
  %699 = vmatprep.mubr.bf16.mxu0 0
  %700 = vmatmul.mubr.bf16.gmra.mrb[0].mxu0 %v616
  %v701 = vpop.f32.mrb[0].mxu0
  %v702 = vadd.f32 0.0, %v701
  %v703 = vpop.f32.mrb[0].mxu0
  %v704 = vpop.f32.mrb[0].mxu0
  %v705 = vadd.f32 0.0, %v704
  %v706 = vpop.f32.mrb[0].mxu0
  %707 = vmatprep.mubr.bf16.mxu0 0
  %708 = vmatmul.mubr.bf16.gmra.mrb[0].mxu0 %v619
  %v709 = vpop.f32.mrb[0].mxu0
  %v710 = vadd.f32 0.0, %v709
  %v711 = vpop.f32.mrb[0].mxu0
  %v712 = vpop.f32.mrb[0].mxu0
  %v713 = vadd.f32 0.0, %v712
  %v714 = vpop.f32.mrb[0].mxu0
  %715 = vmatprep.mubr.bf16.mxu0 0
  %716 = vmatmul.mubr.bf16.gmra.mrb[0].mxu0 %v622
  %v717 = vpop.f32.mrb[0].mxu0
  %v718 = vadd.f32 0.0, %v717
  %v719 = vpop.f32.mrb[0].mxu0
  %v720 = vpop.f32.mrb[0].mxu0
  %v721 = vadd.f32 0.0, %v720
  %v722 = vpop.f32.mrb[0].mxu0
  %723 = vmatprep.mubr.bf16.mxu0 0
  %724 = vmatmul.mubr.bf16.gmra.mrb[0].mxu0 %v625
  %v725 = vpop.f32.mrb[0].mxu0
  %v726 = vadd.f32 0.0, %v725
  %v727 = vpop.f32.mrb[0].mxu0
  %v728 = vpop.f32.mrb[0].mxu0
  %v729 = vadd.f32 0.0, %v728
  %v730 = vpop.f32.mrb[0].mxu0
  %731 = vmatprep.mubr.bf16.mxu0 0
  %732 = vmatmul.mubr.bf16.gmra.mrb[0].mxu0 %v628
  %v733 = vpop.f32.mrb[0].mxu0
  %v734 = vadd.f32 0.0, %v733
  %v735 = vpop.f32.mrb[0].mxu0
  %v736 = vpop.f32.mrb[0].mxu0
  %v737 = vadd.f32 0.0, %v736
  %v738 = vpop.f32.mrb[0].mxu0
  %739 = vmatprep.mubr.bf16.mxu0 0
  %740 = vmatmul.mubr.bf16.gmra.mrb[0].mxu0 %v631
  %v741 = vpop.f32.mrb[0].mxu0
  %v742 = vadd.f32 0.0, %v741
  %v743 = vpop.f32.mrb[0].mxu0
  %v744 = vpop.f32.mrb[0].mxu0
  %v745 = vadd.f32 0.0, %v744
  %v746 = vpop.f32.mrb[0].mxu0
  %747 = vmatprep.mubr.bf16.mxu0 0
  %748 = vmatmul.mubr.bf16.gmra.mrb[0].mxu0 %v634
  %v749 = vpop.f32.mrb[0].mxu0
  %v750 = vadd.f32 0.0, %v749
  %v751 = vpop.f32.mrb[0].mxu0
  %v752 = vpop.f32.mrb[0].mxu0
  %v753 = vadd.f32 0.0, %v752
  %v754 = vpop.f32.mrb[0].mxu0
  %755 = vmatprep.mubr.bf16.mxu0 0
  %756 = vmatmul.mubr.bf16.gmra.mrb[0].mxu0 %v637
  %v757 = vpop.f32.mrb[0].mxu0
  %v758 = vadd.f32 0.0, %v757
  %v759 = vpop.f32.mrb[0].mxu0
  %v760 = vpop.f32.mrb[0].mxu0
  %v761 = vadd.f32 0.0, %v760
  %v762 = vpop.f32.mrb[0].mxu0
  %763 = vmatprep.mubr.bf16.mxu0 0
  %764 = vmatmul.mubr.bf16.gmra.mrb[0].mxu0 %v640
  %v765 = vpop.f32.mrb[0].mxu0
  %v766 = vadd.f32 0.0, %v765
  %v767 = vpop.f32.mrb[0].mxu0
  %v768 = vpop.f32.mrb[0].mxu0
  %v769 = vadd.f32 0.0, %v768
  %v770 = vpop.f32.mrb[0].mxu0
  %771 = vmatprep.mubr.bf16.mxu0 0
  %772 = vmatmul.mubr.bf16.gmra.mrb[0].mxu0 %v643
  %v773 = vpop.f32.mrb[0].mxu0
  %v774 = vadd.f32 0.0, %v773
  %v775 = vpop.f32.mrb[0].mxu0
  %v776 = vpop.f32.mrb[0].mxu0
  %v777 = vadd.f32 0.0, %v776
  %v778 = vpop.f32.mrb[0].mxu0
  %779 = vmatprep.mubr.bf16.mxu0 0
  %780 = vmatmul.mubr.bf16.gmra.mrb[0].mxu0 %v646
  %v781 = vpop.f32.mrb[0].mxu0
  %v782 = vadd.f32 0.0, %v781
  %v783 = vpop.f32.mrb[0].mxu0
  %v784 = vpop.f32.mrb[0].mxu0
  %v785 = vadd.f32 0.0, %v784
  %v786 = vpop.f32.mrb[0].mxu0
  %787 = vmatprep.mubr.bf16.mxu0 0
  %788 = vmatmul.mubr.bf16.gmra.mrb[0].mxu0 %v649
  %v789 = vpop.f32.mrb[0].mxu0
  %v790 = vadd.f32 0.0, %v789
  %v791 = vpop.f32.mrb[0].mxu0
  %v792 = vpop.f32.mrb[0].mxu0
  %v793 = vadd.f32 0.0, %v792
  %v794 = vpop.f32.mrb[0].mxu0
  %795 = vmatprep.mubr.bf16.mxu0 0
  %796 = vmatmul.mubr.bf16.gmra.mrb[0].mxu0 %v652
  %v797 = vpop.f32.mrb[0].mxu0
  %v798 = vadd.f32 0.0, %v797
  %v799 = vpop.f32.mrb[0].mxu0
  %v800 = vpop.f32.mrb[0].mxu0
  %v801 = vadd.f32 0.0, %v800
  %v802 = vpop.f32.mrb[0].mxu0
  %803 = vmatprep.mubr.bf16.mxu0 0
  %804 = vmatmul.mubr.bf16.gmra.mrb[0].mxu0 %v655
  %v805 = vpop.f32.mrb[0].mxu0
  %v806 = vadd.f32 0.0, %v805
  %v807 = vpop.f32.mrb[0].mxu0
  %v808 = vpop.f32.mrb[0].mxu0
  %v809 = vadd.f32 0.0, %v808
  %v810 = vpop.f32.mrb[0].mxu0
  %811 = vmatprep.mubr.bf16.mxu0 0
  %812 = vmatmul.mubr.bf16.gmra.mrb[0].mxu0 %v658
  %v813 = vpop.f32.mrb[0].mxu0
  %v814 = vadd.f32 0.0, %v813
  %v815 = vpop.f32.mrb[0].mxu0
  %v816 = vpop.f32.mrb[0].mxu0
  %v817 = vadd.f32 0.0, %v816
  %v818 = vpop.f32.mrb[0].mxu0
  %819 = vmatprep.mubr.bf16.mxu0 0
  %820 = vmatmul.mubr.bf16.gmra.mrb[0].mxu0 %v661
  %v821 = vpop.f32.mrb[0].mxu0
  %v822 = vadd.f32 0.0, %v821
  %v823 = vpop.f32.mrb[0].mxu0
  %v824 = vpop.f32.mrb[0].mxu0
  %v825 = vadd.f32 0.0, %v824
  %v826 = vpop.f32.mrb[0].mxu0
  %827 = vdwg.mxu0
  %v828 = vadd.f32 %v471, %v702
  %v829 = vadd.f32 %v474, %v705
  %v830 = vadd.f32 %v479, %v710
  %v831 = vadd.f32 %v482, %v713
  %v832 = vadd.f32 %v487, %v718
  %v833 = vadd.f32 %v490, %v721
  %v834 = vadd.f32 %v495, %v726
  %v835 = vadd.f32 %v498, %v729
  %v836 = vadd.f32 %v503, %v734
  %v837 = vadd.f32 %v506, %v737
  %v838 = vadd.f32 %v511, %v742
  %v839 = vadd.f32 %v514, %v745
  %v840 = vadd.f32 %v519, %v750
  %v841 = vadd.f32 %v522, %v753
  %v842 = vadd.f32 %v527, %v758
  %v843 = vadd.f32 %v530, %v761
  %v844 = vadd.f32 %v535, %v766
  %v845 = vadd.f32 %v538, %v769
  %v846 = vadd.f32 %v543, %v774
  %v847 = vadd.f32 %v546, %v777
  %v848 = vadd.f32 %v551, %v782
  %v849 = vadd.f32 %v554, %v785
  %v850 = vadd.f32 %v559, %v790
  %v851 = vadd.f32 %v562, %v793
  %v852 = vadd.f32 %v567, %v798
  %v853 = vadd.f32 %v570, %v801
  %v854 = vadd.f32 %v575, %v806
  %v855 = vadd.f32 %v578, %v809
  %v856 = vadd.f32 %v583, %v814
  %v857 = vadd.f32 %v586, %v817
  %v858 = vadd.f32 %v591, %v822
  %v859 = vadd.f32 %v594, %v825
  %v860 = vld [vmem:[%s6] sm:$0x1]
  %v862 = vlaneseq
  %v863 = vshrl.u32 %v862, 7
  %v864 = vsub.s32 0, %v863
  %v865 = vrot.slane %v860, %v864
  %v867 = vadd.f32 %v828, %v865
  %v868 = vadd.f32 %v829, %v865
  %v869 = vadd.f32 %v830, %v865
  %v870 = vadd.f32 %v831, %v865
  %v871 = vadd.f32 %v832, %v865
  %v872 = vadd.f32 %v833, %v865
  %v873 = vadd.f32 %v834, %v865
  %v874 = vadd.f32 %v835, %v865
  %v875 = vadd.f32 %v836, %v865
  %v876 = vadd.f32 %v837, %v865
  %v877 = vadd.f32 %v838, %v865
  %v878 = vadd.f32 %v839, %v865
  %v879 = vadd.f32 %v840, %v865
  %v880 = vadd.f32 %v841, %v865
  %v881 = vadd.f32 %v842, %v865
  %v882 = vadd.f32 %v843, %v865
  %v883 = vadd.f32 %v844, %v865
  %v884 = vadd.f32 %v845, %v865
  %v885 = vadd.f32 %v846, %v865
  %v886 = vadd.f32 %v847, %v865
  %v887 = vadd.f32 %v848, %v865
  %v888 = vadd.f32 %v849, %v865
  %v889 = vadd.f32 %v850, %v865
  %v890 = vadd.f32 %v851, %v865
  %v891 = vadd.f32 %v852, %v865
  %v892 = vadd.f32 %v853, %v865
  %v893 = vadd.f32 %v854, %v865
  %v894 = vadd.f32 %v855, %v865
  %v895 = vadd.f32 %v856, %v865
  %v896 = vadd.f32 %v857, %v865
  %v897 = vadd.f32 %v858, %v865
  %v898 = vadd.f32 %v859, %v865
  %v899 = vmax.f32 %v867, 0.0
  %v900 = vmax.f32 %v868, 0.0
  %v901 = vmax.f32 %v869, 0.0
  %v902 = vmax.f32 %v870, 0.0
  %v903 = vmax.f32 %v871, 0.0
  %v904 = vmax.f32 %v872, 0.0
  %v905 = vmax.f32 %v873, 0.0
  %v906 = vmax.f32 %v874, 0.0
  %v907 = vmax.f32 %v875, 0.0
  %v908 = vmax.f32 %v876, 0.0
  %v909 = vmax.f32 %v877, 0.0
  %v910 = vmax.f32 %v878, 0.0
  %v911 = vmax.f32 %v879, 0.0
  %v912 = vmax.f32 %v880, 0.0
  %v913 = vmax.f32 %v881, 0.0
  %v914 = vmax.f32 %v882, 0.0
  %v915 = vmax.f32 %v883, 0.0
  %v916 = vmax.f32 %v884, 0.0
  %v917 = vmax.f32 %v885, 0.0
  %v918 = vmax.f32 %v886, 0.0
  %v919 = vmax.f32 %v887, 0.0
  %v920 = vmax.f32 %v888, 0.0
  %v921 = vmax.f32 %v889, 0.0
  %v922 = vmax.f32 %v890, 0.0
  %v923 = vmax.f32 %v891, 0.0
  %v924 = vmax.f32 %v892, 0.0
  %v925 = vmax.f32 %v893, 0.0
  %v926 = vmax.f32 %v894, 0.0
  %v927 = vmax.f32 %v895, 0.0
  %v928 = vmax.f32 %v896, 0.0
  %v929 = vmax.f32 %v897, 0.0
  %v930 = vmax.f32 %v898, 0.0
  %v931 = vpack.c.bf16 %v900, %v899
  %v932 = vpack.c.bf16 %v902, %v901
  %v933 = vpack.c.bf16 %v904, %v903
  %v934 = vpack.c.bf16 %v906, %v905
  %v935 = vpack.c.bf16 %v908, %v907
  %v936 = vpack.c.bf16 %v910, %v909
  %v937 = vpack.c.bf16 %v912, %v911
  %v938 = vpack.c.bf16 %v914, %v913
  %v939 = vpack.c.bf16 %v916, %v915
  %v940 = vpack.c.bf16 %v918, %v917
  %v941 = vpack.c.bf16 %v920, %v919
  %v942 = vpack.c.bf16 %v922, %v921
  %v943 = vpack.c.bf16 %v924, %v923
  %v944 = vpack.c.bf16 %v926, %v925
  %v945 = vpack.c.bf16 %v928, %v927
  %v946 = vpack.c.bf16 %v930, %v929
  %v947 = vld [vmem:[%s7] sm:$0xf]
  %v948 = vld [vmem:[%s7 + $0x4] sm:$0xf]
  %v949 = vld [vmem:[%s7 + $0x8] sm:$0xf]
  %v950 = vld [vmem:[%s7 + $0xc] sm:$0xf]
  %v951 = vld [vmem:[%s7 + $0x10] sm:$0xf]
  %v952 = vld [vmem:[%s7 + $0x14] sm:$0xf]
  %v953 = vld [vmem:[%s7 + $0x18] sm:$0xf]
  %v954 = vld [vmem:[%s7 + $0x1c] sm:$0xf]
  %v955 = vld [vmem:[%s7 + $0x20] sm:$0xf]
  %v956 = vld [vmem:[%s7 + $0x24] sm:$0xf]
  %v957 = vld [vmem:[%s7 + $0x28] sm:$0xf]
  %v958 = vld [vmem:[%s7 + $0x2c] sm:$0xf]
  %v959 = vld [vmem:[%s7 + $0x30] sm:$0xf]
  %v960 = vld [vmem:[%s7 + $0x34] sm:$0xf]
  %v961 = vld [vmem:[%s7 + $0x38] sm:$0xf]
  %v962 = vld [vmem:[%s7 + $0x3c] sm:$0xf]
  %v963 = vld [vmem:[%s9] sm:$0x1]
  %v965 = vlaneseq
  %v966 = vshrl.u32 %v965, 7
  %v967 = vsub.s32 0, %v966
  %v968 = vrot.slane %v963, %v967
  %v986 = vunpack.c.l.b16 %v947
  %v987 = vunpack.c.l.b16 %v948
  %v988 = vunpack.c.l.b16 %v949
  %v989 = vunpack.c.l.b16 %v950
  %v990 = vunpack.c.l.b16 %v951
  %v991 = vunpack.c.l.b16 %v952
  %v992 = vunpack.c.l.b16 %v953
  %v993 = vunpack.c.l.b16 %v954
  %v994 = vunpack.c.l.b16 %v955
  %v995 = vunpack.c.l.b16 %v956
  %v996 = vunpack.c.l.b16 %v957
  %v997 = vunpack.c.l.b16 %v958
  %v998 = vunpack.c.l.b16 %v959
  %v999 = vunpack.c.l.b16 %v960
  %v1000 = vunpack.c.l.b16 %v961
  %v1001 = vunpack.c.l.b16 %v962
  %v1002 = vpack.c.b16 %v987, %v986
  %v1003 = vpack.c.b16 %v989, %v988
  %v1004 = vpack.c.b16 %v991, %v990
  %v1005 = vpack.c.b16 %v993, %v992
  %v1006 = vpack.c.b16 %v995, %v994
  %v1007 = vpack.c.b16 %v997, %v996
  %v1008 = vpack.c.b16 %v999, %v998
  %v1009 = vpack.c.b16 %v1001, %v1000
  %1018 = vmatprep.subr.bf16.mxu0 0
  %1019 = vmatpush1.bf16.msra.mxu0 %v1002
  %1020 = vmatprep.subr.bf16.mxu0 0
  %1021 = vmatpush1.bf16.msra.mxu0 %v1003
  %1022 = vmatprep.subr.bf16.mxu0 0
  %1023 = vmatpush1.bf16.msra.mxu0 %v1004
  %1024 = vmatprep.subr.bf16.mxu0 0
  %1025 = vmatpush1.bf16.msra.mxu0 %v1005
  %1026 = vmatprep.subr.bf16.mxu0 0
  %1027 = vmatpush1.bf16.msra.mxu0 %v1006
  %1028 = vmatprep.subr.bf16.mxu0 0
  %1029 = vmatpush1.bf16.msra.mxu0 %v1007
  %1030 = vmatprep.subr.bf16.mxu0 0
  %1031 = vmatpush1.bf16.msra.mxu0 %v1008
  %1032 = vmatprep.subr.bf16.mxu0 0
  %1033 = vmatpush1.bf16.msra.mxu0 %v1009
  %1034 = vmatprep.subr.bf16.mxu0 0
  %1035 = vmatpush1.bf16.msra.mxu0 0
  %1036 = vmatprep.subr.bf16.mxu0 0
  %1037 = vmatpush1.bf16.msra.mxu0 0
  %1038 = vmatprep.subr.bf16.mxu0 0
  %1039 = vmatpush1.bf16.msra.mxu0 0
  %1040 = vmatprep.subr.bf16.mxu0 0
  %1041 = vmatpush1.bf16.msra.mxu0 0
  %1042 = vmatprep.subr.bf16.mxu0 0
  %1043 = vmatpush1.bf16.msra.mxu0 0
  %1044 = vmatprep.subr.bf16.mxu0 0
  %1045 = vmatpush1.bf16.msra.mxu0 0
  %1046 = vmatprep.subr.bf16.mxu0 0
  %1047 = vmatpush1.bf16.msra.mxu0 0
  %1048 = vmatprep.subr.bf16.mxu0 0
  %1049 = vmatpush1.bf16.msra.mxu0 0
  %1050 = vmatprep.mubr.bf16.mxu0 0
  %1051 = vmatmul.mubr.bf16.gmra.mrb[0].mxu0 %v931
  %v1052 = vpop.f32.mrb[0].mxu0
  %v1053 = vadd.f32 %v968, %v1052
  %v1054 = vpop.f32.mrb[0].mxu0
  %v1055 = vpop.f32.mrb[0].mxu0
  %v1056 = vadd.f32 %v968, %v1055
  %v1057 = vpop.f32.mrb[0].mxu0
  %1058 = vmatprep.mubr.bf16.mxu0 0
  %1059 = vmatmul.mubr.bf16.gmra.mrb[0].mxu0 %v932
  %v1060 = vpop.f32.mrb[0].mxu0
  %v1061 = vadd.f32 %v968, %v1060
  %v1062 = vpop.f32.mrb[0].mxu0
  %v1063 = vpop.f32.mrb[0].mxu0
  %v1064 = vadd.f32 %v968, %v1063
  %v1065 = vpop.f32.mrb[0].mxu0
  %1066 = vmatprep.mubr.bf16.mxu0 0
  %1067 = vmatmul.mubr.bf16.gmra.mrb[0].mxu0 %v933
  %v1068 = vpop.f32.mrb[0].mxu0
  %v1069 = vadd.f32 %v968, %v1068
  %v1070 = vpop.f32.mrb[0].mxu0
  %v1071 = vpop.f32.mrb[0].mxu0
  %v1072 = vadd.f32 %v968, %v1071
  %v1073 = vpop.f32.mrb[0].mxu0
  %1074 = vmatprep.mubr.bf16.mxu0 0
  %1075 = vmatmul.mubr.bf16.gmra.mrb[0].mxu0 %v934
  %v1076 = vpop.f32.mrb[0].mxu0
  %v1077 = vadd.f32 %v968, %v1076
  %v1078 = vpop.f32.mrb[0].mxu0
  %v1079 = vpop.f32.mrb[0].mxu0
  %v1080 = vadd.f32 %v968, %v1079
  %v1081 = vpop.f32.mrb[0].mxu0
  %1082 = vmatprep.mubr.bf16.mxu0 0
  %1083 = vmatmul.mubr.bf16.gmra.mrb[0].mxu0 %v935
  %v1084 = vpop.f32.mrb[0].mxu0
  %v1085 = vadd.f32 %v968, %v1084
  %v1086 = vpop.f32.mrb[0].mxu0
  %v1087 = vpop.f32.mrb[0].mxu0
  %v1088 = vadd.f32 %v968, %v1087
  %v1089 = vpop.f32.mrb[0].mxu0
  %1090 = vmatprep.mubr.bf16.mxu0 0
  %1091 = vmatmul.mubr.bf16.gmra.mrb[0].mxu0 %v936
  %v1092 = vpop.f32.mrb[0].mxu0
  %v1093 = vadd.f32 %v968, %v1092
  %v1094 = vpop.f32.mrb[0].mxu0
  %v1095 = vpop.f32.mrb[0].mxu0
  %v1096 = vadd.f32 %v968, %v1095
  %v1097 = vpop.f32.mrb[0].mxu0
  %1098 = vmatprep.mubr.bf16.mxu0 0
  %1099 = vmatmul.mubr.bf16.gmra.mrb[0].mxu0 %v937
  %v1100 = vpop.f32.mrb[0].mxu0
  %v1101 = vadd.f32 %v968, %v1100
  %v1102 = vpop.f32.mrb[0].mxu0
  %v1103 = vpop.f32.mrb[0].mxu0
  %v1104 = vadd.f32 %v968, %v1103
  %v1105 = vpop.f32.mrb[0].mxu0
  %1106 = vmatprep.mubr.bf16.mxu0 0
  %1107 = vmatmul.mubr.bf16.gmra.mrb[0].mxu0 %v938
  %v1108 = vpop.f32.mrb[0].mxu0
  %v1109 = vadd.f32 %v968, %v1108
  %v1110 = vpop.f32.mrb[0].mxu0
  %v1111 = vpop.f32.mrb[0].mxu0
  %v1112 = vadd.f32 %v968, %v1111
  %v1113 = vpop.f32.mrb[0].mxu0
  %1114 = vmatprep.mubr.bf16.mxu0 0
  %1115 = vmatmul.mubr.bf16.gmra.mrb[0].mxu0 %v939
  %v1116 = vpop.f32.mrb[0].mxu0
  %v1117 = vadd.f32 %v968, %v1116
  %v1118 = vpop.f32.mrb[0].mxu0
  %v1119 = vpop.f32.mrb[0].mxu0
  %v1120 = vadd.f32 %v968, %v1119
  %v1121 = vpop.f32.mrb[0].mxu0
  %1122 = vmatprep.mubr.bf16.mxu0 0
  %1123 = vmatmul.mubr.bf16.gmra.mrb[0].mxu0 %v940
  %v1124 = vpop.f32.mrb[0].mxu0
  %v1125 = vadd.f32 %v968, %v1124
  %v1126 = vpop.f32.mrb[0].mxu0
  %v1127 = vpop.f32.mrb[0].mxu0
  %v1128 = vadd.f32 %v968, %v1127
  %v1129 = vpop.f32.mrb[0].mxu0
  %1130 = vmatprep.mubr.bf16.mxu0 0
  %1131 = vmatmul.mubr.bf16.gmra.mrb[0].mxu0 %v941
  %v1132 = vpop.f32.mrb[0].mxu0
  %v1133 = vadd.f32 %v968, %v1132
  %v1134 = vpop.f32.mrb[0].mxu0
  %v1135 = vpop.f32.mrb[0].mxu0
  %v1136 = vadd.f32 %v968, %v1135
  %v1137 = vpop.f32.mrb[0].mxu0
  %1138 = vmatprep.mubr.bf16.mxu0 0
  %1139 = vmatmul.mubr.bf16.gmra.mrb[0].mxu0 %v942
  %v1140 = vpop.f32.mrb[0].mxu0
  %v1141 = vadd.f32 %v968, %v1140
  %v1142 = vpop.f32.mrb[0].mxu0
  %v1143 = vpop.f32.mrb[0].mxu0
  %v1144 = vadd.f32 %v968, %v1143
  %v1145 = vpop.f32.mrb[0].mxu0
  %1146 = vmatprep.mubr.bf16.mxu0 0
  %1147 = vmatmul.mubr.bf16.gmra.mrb[0].mxu0 %v943
  %v1148 = vpop.f32.mrb[0].mxu0
  %v1149 = vadd.f32 %v968, %v1148
  %v1150 = vpop.f32.mrb[0].mxu0
  %v1151 = vpop.f32.mrb[0].mxu0
  %v1152 = vadd.f32 %v968, %v1151
  %v1153 = vpop.f32.mrb[0].mxu0
  %1154 = vmatprep.mubr.bf16.mxu0 0
  %1155 = vmatmul.mubr.bf16.gmra.mrb[0].mxu0 %v944
  %v1156 = vpop.f32.mrb[0].mxu0
  %v1157 = vadd.f32 %v968, %v1156
  %v1158 = vpop.f32.mrb[0].mxu0
  %v1159 = vpop.f32.mrb[0].mxu0
  %v1160 = vadd.f32 %v968, %v1159
  %v1161 = vpop.f32.mrb[0].mxu0
  %1162 = vmatprep.mubr.bf16.mxu0 0
  %1163 = vmatmul.mubr.bf16.gmra.mrb[0].mxu0 %v945
  %v1164 = vpop.f32.mrb[0].mxu0
  %v1165 = vadd.f32 %v968, %v1164
  %v1166 = vpop.f32.mrb[0].mxu0
  %v1167 = vpop.f32.mrb[0].mxu0
  %v1168 = vadd.f32 %v968, %v1167
  %v1169 = vpop.f32.mrb[0].mxu0
  %1170 = vmatprep.mubr.bf16.mxu0 0
  %1171 = vmatmul.mubr.bf16.gmra.mrb[0].mxu0 %v946
  %v1172 = vpop.f32.mrb[0].mxu0
  %v1173 = vadd.f32 %v968, %v1172
  %v1174 = vpop.f32.mrb[0].mxu0
  %v1175 = vpop.f32.mrb[0].mxu0
  %v1176 = vadd.f32 %v968, %v1175
  %v1177 = vpop.f32.mrb[0].mxu0
  %1178 = vdwg.mxu0
  %v1179 = vadd.f32 %v41, %v1053
  %v1180 = vadd.f32 %v42, %v1056
  %v1181 = vadd.f32 %v43, %v1061
  %v1182 = vadd.f32 %v44, %v1064
  %v1183 = vadd.f32 %v45, %v1069
  %v1184 = vadd.f32 %v46, %v1072
  %v1185 = vadd.f32 %v47, %v1077
  %v1186 = vadd.f32 %v48, %v1080
  %v1187 = vadd.f32 %v49, %v1085
  %v1188 = vadd.f32 %v50, %v1088
  %v1189 = vadd.f32 %v51, %v1093
  %v1190 = vadd.f32 %v52, %v1096
  %v1191 = vadd.f32 %v53, %v1101
  %v1192 = vadd.f32 %v54, %v1104
  %v1193 = vadd.f32 %v55, %v1109
  %v1194 = vadd.f32 %v56, %v1112
  %v1195 = vadd.f32 %v57, %v1117
  %v1196 = vadd.f32 %v58, %v1120
  %v1197 = vadd.f32 %v59, %v1125
  %v1198 = vadd.f32 %v60, %v1128
  %v1199 = vadd.f32 %v61, %v1133
  %v1200 = vadd.f32 %v62, %v1136
  %v1201 = vadd.f32 %v63, %v1141
  %v1202 = vadd.f32 %v64, %v1144
  %v1203 = vadd.f32 %v65, %v1149
  %v1204 = vadd.f32 %v66, %v1152
  %v1205 = vadd.f32 %v67, %v1157
  %v1206 = vadd.f32 %v68, %v1160
  %v1207 = vadd.f32 %v69, %v1165
  %v1208 = vadd.f32 %v70, %v1168
  %v1209 = vadd.f32 %v71, %v1173
  %v1210 = vadd.f32 %v72, %v1176
  %1211 = vst.msk [vmem:[%s11] sm:$0xff] %vm171, %v1179
  %1212 = vst.msk [vmem:[%s11 + $0x8] sm:$0xff] %vm171, %v1180
  %1213 = vst.msk [vmem:[%s11 + $0x10] sm:$0xff] %vm171, %v1181
  %1214 = vst.msk [vmem:[%s11 + $0x18] sm:$0xff] %vm171, %v1182
  %1215 = vst.msk [vmem:[%s11 + $0x20] sm:$0xff] %vm171, %v1183
  %1216 = vst.msk [vmem:[%s11 + $0x28] sm:$0xff] %vm171, %v1184
  %1217 = vst.msk [vmem:[%s11 + $0x30] sm:$0xff] %vm171, %v1185
  %1218 = vst.msk [vmem:[%s11 + $0x38] sm:$0xff] %vm171, %v1186
  %1219 = vst.msk [vmem:[%s11 + $0x40] sm:$0xff] %vm171, %v1187
  %1220 = vst.msk [vmem:[%s11 + $0x48] sm:$0xff] %vm171, %v1188
  %1221 = vst.msk [vmem:[%s11 + $0x50] sm:$0xff] %vm171, %v1189
  %1222 = vst.msk [vmem:[%s11 + $0x58] sm:$0xff] %vm171, %v1190
  %1223 = vst.msk [vmem:[%s11 + $0x60] sm:$0xff] %vm171, %v1191
  %1224 = vst.msk [vmem:[%s11 + $0x68] sm:$0xff] %vm171, %v1192
  %1225 = vst.msk [vmem:[%s11 + $0x70] sm:$0xff] %vm171, %v1193
  %1226 = vst.msk [vmem:[%s11 + $0x78] sm:$0xff] %vm171, %v1194
  %1227 = vst.msk [vmem:[%s11 + $0x80] sm:$0xff] %vm171, %v1195
  %1228 = vst.msk [vmem:[%s11 + $0x88] sm:$0xff] %vm171, %v1196
  %1229 = vst.msk [vmem:[%s11 + $0x90] sm:$0xff] %vm171, %v1197
  %1230 = vst.msk [vmem:[%s11 + $0x98] sm:$0xff] %vm171, %v1198
  %1231 = vst.msk [vmem:[%s11 + $0xa0] sm:$0xff] %vm171, %v1199
  %1232 = vst.msk [vmem:[%s11 + $0xa8] sm:$0xff] %vm171, %v1200
  %1233 = vst.msk [vmem:[%s11 + $0xb0] sm:$0xff] %vm171, %v1201
  %1234 = vst.msk [vmem:[%s11 + $0xb8] sm:$0xff] %vm171, %v1202
  %1235 = vst.msk [vmem:[%s11 + $0xc0] sm:$0xff] %vm171, %v1203
  %1236 = vst.msk [vmem:[%s11 + $0xc8] sm:$0xff] %vm171, %v1204
  %1237 = vst.msk [vmem:[%s11 + $0xd0] sm:$0xff] %vm171, %v1205
  %1238 = vst.msk [vmem:[%s11 + $0xd8] sm:$0xff] %vm171, %v1206
  %1239 = vst.msk [vmem:[%s11 + $0xe0] sm:$0xff] %vm171, %v1207
  %1240 = vst.msk [vmem:[%s11 + $0xe8] sm:$0xff] %vm171, %v1208
  %1241 = vst.msk [vmem:[%s11 + $0xf0] sm:$0xff] %vm171, %v1209
  %1242 = vst.msk [vmem:[%s11 + $0xf8] sm:$0xff] %vm171, %v1210
  %v1243 = vld [vmem:[%s8] sm:$0xf]
  %v1244 = vld [vmem:[%s8 + $0x4] sm:$0xf]
  %v1245 = vld [vmem:[%s8 + $0x8] sm:$0xf]
  %v1246 = vld [vmem:[%s8 + $0xc] sm:$0xf]
  %v1247 = vld [vmem:[%s8 + $0x10] sm:$0xf]
  %v1248 = vld [vmem:[%s8 + $0x14] sm:$0xf]
  %v1249 = vld [vmem:[%s8 + $0x18] sm:$0xf]
  %v1250 = vld [vmem:[%s8 + $0x1c] sm:$0xf]
  %v1251 = vld [vmem:[%s8 + $0x20] sm:$0xf]
  %v1252 = vld [vmem:[%s8 + $0x24] sm:$0xf]
  %v1253 = vld [vmem:[%s8 + $0x28] sm:$0xf]
  %v1254 = vld [vmem:[%s8 + $0x2c] sm:$0xf]
  %v1255 = vld [vmem:[%s8 + $0x30] sm:$0xf]
  %v1256 = vld [vmem:[%s8 + $0x34] sm:$0xf]
  %v1257 = vld [vmem:[%s8 + $0x38] sm:$0xf]
  %v1258 = vld [vmem:[%s8 + $0x3c] sm:$0xf]
  %v1259 = vld [vmem:[%s10] sm:$0x1]
  %v1261 = vlaneseq
  %v1262 = vshrl.u32 %v1261, 7
  %v1263 = vsub.s32 0, %v1262
  %v1264 = vrot.slane %v1259, %v1263
  %v1282 = vunpack.c.l.b16 %v1243
  %v1283 = vunpack.c.l.b16 %v1244
  %v1284 = vunpack.c.l.b16 %v1245
  %v1285 = vunpack.c.l.b16 %v1246
  %v1286 = vunpack.c.l.b16 %v1247
  %v1287 = vunpack.c.l.b16 %v1248
  %v1288 = vunpack.c.l.b16 %v1249
  %v1289 = vunpack.c.l.b16 %v1250
  %v1290 = vunpack.c.l.b16 %v1251
  %v1291 = vunpack.c.l.b16 %v1252
  %v1292 = vunpack.c.l.b16 %v1253
  %v1293 = vunpack.c.l.b16 %v1254
  %v1294 = vunpack.c.l.b16 %v1255
  %v1295 = vunpack.c.l.b16 %v1256
  %v1296 = vunpack.c.l.b16 %v1257
  %v1297 = vunpack.c.l.b16 %v1258
  %v1298 = vpack.c.b16 %v1283, %v1282
  %v1299 = vpack.c.b16 %v1285, %v1284
  %v1300 = vpack.c.b16 %v1287, %v1286
  %v1301 = vpack.c.b16 %v1289, %v1288
  %v1302 = vpack.c.b16 %v1291, %v1290
  %v1303 = vpack.c.b16 %v1293, %v1292
  %v1304 = vpack.c.b16 %v1295, %v1294
  %v1305 = vpack.c.b16 %v1297, %v1296
  %1314 = vmatprep.subr.bf16.mxu0 0
  %1315 = vmatpush1.bf16.msra.mxu0 %v1298
  %1316 = vmatprep.subr.bf16.mxu0 0
  %1317 = vmatpush1.bf16.msra.mxu0 %v1299
  %1318 = vmatprep.subr.bf16.mxu0 0
  %1319 = vmatpush1.bf16.msra.mxu0 %v1300
  %1320 = vmatprep.subr.bf16.mxu0 0
  %1321 = vmatpush1.bf16.msra.mxu0 %v1301
  %1322 = vmatprep.subr.bf16.mxu0 0
  %1323 = vmatpush1.bf16.msra.mxu0 %v1302
  %1324 = vmatprep.subr.bf16.mxu0 0
  %1325 = vmatpush1.bf16.msra.mxu0 %v1303
  %1326 = vmatprep.subr.bf16.mxu0 0
  %1327 = vmatpush1.bf16.msra.mxu0 %v1304
  %1328 = vmatprep.subr.bf16.mxu0 0
  %1329 = vmatpush1.bf16.msra.mxu0 %v1305
  %1330 = vmatprep.subr.bf16.mxu0 0
  %1331 = vmatpush1.bf16.msra.mxu0 0
  %1332 = vmatprep.subr.bf16.mxu0 0
  %1333 = vmatpush1.bf16.msra.mxu0 0
  %1334 = vmatprep.subr.bf16.mxu0 0
  %1335 = vmatpush1.bf16.msra.mxu0 0
  %1336 = vmatprep.subr.bf16.mxu0 0
  %1337 = vmatpush1.bf16.msra.mxu0 0
  %1338 = vmatprep.subr.bf16.mxu0 0
  %1339 = vmatpush1.bf16.msra.mxu0 0
  %1340 = vmatprep.subr.bf16.mxu0 0
  %1341 = vmatpush1.bf16.msra.mxu0 0
  %1342 = vmatprep.subr.bf16.mxu0 0
  %1343 = vmatpush1.bf16.msra.mxu0 0
  %1344 = vmatprep.subr.bf16.mxu0 0
  %1345 = vmatpush1.bf16.msra.mxu0 0
  %1346 = vmatprep.mubr.bf16.mxu0 0
  %1347 = vmatmul.mubr.bf16.gmra.mrb[0].mxu0 %v931
  %v1348 = vpop.f32.mrb[0].mxu0
  %v1349 = vadd.f32 %v1264, %v1348
  %v1350 = vpop.f32.mrb[0].mxu0
  %v1351 = vpop.f32.mrb[0].mxu0
  %v1352 = vadd.f32 %v1264, %v1351
  %v1353 = vpop.f32.mrb[0].mxu0
  %1354 = vmatprep.mubr.bf16.mxu0 0
  %1355 = vmatmul.mubr.bf16.gmra.mrb[0].mxu0 %v932
  %v1356 = vpop.f32.mrb[0].mxu0
  %v1357 = vadd.f32 %v1264, %v1356
  %v1358 = vpop.f32.mrb[0].mxu0
  %v1359 = vpop.f32.mrb[0].mxu0
  %v1360 = vadd.f32 %v1264, %v1359
  %v1361 = vpop.f32.mrb[0].mxu0
  %1362 = vmatprep.mubr.bf16.mxu0 0
  %1363 = vmatmul.mubr.bf16.gmra.mrb[0].mxu0 %v933
  %v1364 = vpop.f32.mrb[0].mxu0
  %v1365 = vadd.f32 %v1264, %v1364
  %v1366 = vpop.f32.mrb[0].mxu0
  %v1367 = vpop.f32.mrb[0].mxu0
  %v1368 = vadd.f32 %v1264, %v1367
  %v1369 = vpop.f32.mrb[0].mxu0
  %1370 = vmatprep.mubr.bf16.mxu0 0
  %1371 = vmatmul.mubr.bf16.gmra.mrb[0].mxu0 %v934
  %v1372 = vpop.f32.mrb[0].mxu0
  %v1373 = vadd.f32 %v1264, %v1372
  %v1374 = vpop.f32.mrb[0].mxu0
  %v1375 = vpop.f32.mrb[0].mxu0
  %v1376 = vadd.f32 %v1264, %v1375
  %v1377 = vpop.f32.mrb[0].mxu0
  %1378 = vmatprep.mubr.bf16.mxu0 0
  %1379 = vmatmul.mubr.bf16.gmra.mrb[0].mxu0 %v935
  %v1380 = vpop.f32.mrb[0].mxu0
  %v1381 = vadd.f32 %v1264, %v1380
  %v1382 = vpop.f32.mrb[0].mxu0
  %v1383 = vpop.f32.mrb[0].mxu0
  %v1384 = vadd.f32 %v1264, %v1383
  %v1385 = vpop.f32.mrb[0].mxu0
  %1386 = vmatprep.mubr.bf16.mxu0 0
  %1387 = vmatmul.mubr.bf16.gmra.mrb[0].mxu0 %v936
  %v1388 = vpop.f32.mrb[0].mxu0
  %v1389 = vadd.f32 %v1264, %v1388
  %v1390 = vpop.f32.mrb[0].mxu0
  %v1391 = vpop.f32.mrb[0].mxu0
  %v1392 = vadd.f32 %v1264, %v1391
  %v1393 = vpop.f32.mrb[0].mxu0
  %1394 = vmatprep.mubr.bf16.mxu0 0
  %1395 = vmatmul.mubr.bf16.gmra.mrb[0].mxu0 %v937
  %v1396 = vpop.f32.mrb[0].mxu0
  %v1397 = vadd.f32 %v1264, %v1396
  %v1398 = vpop.f32.mrb[0].mxu0
  %v1399 = vpop.f32.mrb[0].mxu0
  %v1400 = vadd.f32 %v1264, %v1399
  %v1401 = vpop.f32.mrb[0].mxu0
  %1402 = vmatprep.mubr.bf16.mxu0 0
  %1403 = vmatmul.mubr.bf16.gmra.mrb[0].mxu0 %v938
  %v1404 = vpop.f32.mrb[0].mxu0
  %v1405 = vadd.f32 %v1264, %v1404
  %v1406 = vpop.f32.mrb[0].mxu0
  %v1407 = vpop.f32.mrb[0].mxu0
  %v1408 = vadd.f32 %v1264, %v1407
  %v1409 = vpop.f32.mrb[0].mxu0
  %1410 = vmatprep.mubr.bf16.mxu0 0
  %1411 = vmatmul.mubr.bf16.gmra.mrb[0].mxu0 %v939
  %v1412 = vpop.f32.mrb[0].mxu0
  %v1413 = vadd.f32 %v1264, %v1412
  %v1414 = vpop.f32.mrb[0].mxu0
  %v1415 = vpop.f32.mrb[0].mxu0
  %v1416 = vadd.f32 %v1264, %v1415
  %v1417 = vpop.f32.mrb[0].mxu0
  %1418 = vmatprep.mubr.bf16.mxu0 0
  %1419 = vmatmul.mubr.bf16.gmra.mrb[0].mxu0 %v940
  %v1420 = vpop.f32.mrb[0].mxu0
  %v1421 = vadd.f32 %v1264, %v1420
  %v1422 = vpop.f32.mrb[0].mxu0
  %v1423 = vpop.f32.mrb[0].mxu0
  %v1424 = vadd.f32 %v1264, %v1423
  %v1425 = vpop.f32.mrb[0].mxu0
  %1426 = vmatprep.mubr.bf16.mxu0 0
  %1427 = vmatmul.mubr.bf16.gmra.mrb[0].mxu0 %v941
  %v1428 = vpop.f32.mrb[0].mxu0
  %v1429 = vadd.f32 %v1264, %v1428
  %v1430 = vpop.f32.mrb[0].mxu0
  %v1431 = vpop.f32.mrb[0].mxu0
  %v1432 = vadd.f32 %v1264, %v1431
  %v1433 = vpop.f32.mrb[0].mxu0
  %1434 = vmatprep.mubr.bf16.mxu0 0
  %1435 = vmatmul.mubr.bf16.gmra.mrb[0].mxu0 %v942
  %v1436 = vpop.f32.mrb[0].mxu0
  %v1437 = vadd.f32 %v1264, %v1436
  %v1438 = vpop.f32.mrb[0].mxu0
  %v1439 = vpop.f32.mrb[0].mxu0
  %v1440 = vadd.f32 %v1264, %v1439
  %v1441 = vpop.f32.mrb[0].mxu0
  %1442 = vmatprep.mubr.bf16.mxu0 0
  %1443 = vmatmul.mubr.bf16.gmra.mrb[0].mxu0 %v943
  %v1444 = vpop.f32.mrb[0].mxu0
  %v1445 = vadd.f32 %v1264, %v1444
  %v1446 = vpop.f32.mrb[0].mxu0
  %v1447 = vpop.f32.mrb[0].mxu0
  %v1448 = vadd.f32 %v1264, %v1447
  %v1449 = vpop.f32.mrb[0].mxu0
  %1450 = vmatprep.mubr.bf16.mxu0 0
  %1451 = vmatmul.mubr.bf16.gmra.mrb[0].mxu0 %v944
  %v1452 = vpop.f32.mrb[0].mxu0
  %v1453 = vadd.f32 %v1264, %v1452
  %v1454 = vpop.f32.mrb[0].mxu0
  %v1455 = vpop.f32.mrb[0].mxu0
  %v1456 = vadd.f32 %v1264, %v1455
  %v1457 = vpop.f32.mrb[0].mxu0
  %1458 = vmatprep.mubr.bf16.mxu0 0
  %1459 = vmatmul.mubr.bf16.gmra.mrb[0].mxu0 %v945
  %v1460 = vpop.f32.mrb[0].mxu0
  %v1461 = vadd.f32 %v1264, %v1460
  %v1462 = vpop.f32.mrb[0].mxu0
  %v1463 = vpop.f32.mrb[0].mxu0
  %v1464 = vadd.f32 %v1264, %v1463
  %v1465 = vpop.f32.mrb[0].mxu0
  %1466 = vmatprep.mubr.bf16.mxu0 0
  %1467 = vmatmul.mubr.bf16.gmra.mrb[0].mxu0 %v946
  %v1468 = vpop.f32.mrb[0].mxu0
  %v1469 = vadd.f32 %v1264, %v1468
  %v1470 = vpop.f32.mrb[0].mxu0
  %v1471 = vpop.f32.mrb[0].mxu0
  %v1472 = vadd.f32 %v1264, %v1471
  %v1473 = vpop.f32.mrb[0].mxu0
  %1474 = vdwg.mxu0
  %v1475 = vadd.f32 %v73, %v1349
  %v1476 = vadd.f32 %v74, %v1352
  %v1477 = vadd.f32 %v75, %v1357
  %v1478 = vadd.f32 %v76, %v1360
  %v1479 = vadd.f32 %v77, %v1365
  %v1480 = vadd.f32 %v78, %v1368
  %v1481 = vadd.f32 %v79, %v1373
  %v1482 = vadd.f32 %v80, %v1376
  %v1483 = vadd.f32 %v81, %v1381
  %v1484 = vadd.f32 %v82, %v1384
  %v1485 = vadd.f32 %v83, %v1389
  %v1486 = vadd.f32 %v84, %v1392
  %v1487 = vadd.f32 %v85, %v1397
  %v1488 = vadd.f32 %v86, %v1400
  %v1489 = vadd.f32 %v87, %v1405
  %v1490 = vadd.f32 %v88, %v1408
  %v1491 = vadd.f32 %v89, %v1413
  %v1492 = vadd.f32 %v90, %v1416
  %v1493 = vadd.f32 %v91, %v1421
  %v1494 = vadd.f32 %v92, %v1424
  %v1495 = vadd.f32 %v93, %v1429
  %v1496 = vadd.f32 %v94, %v1432
  %v1497 = vadd.f32 %v95, %v1437
  %v1498 = vadd.f32 %v96, %v1440
  %v1499 = vadd.f32 %v97, %v1445
  %v1500 = vadd.f32 %v98, %v1448
  %v1501 = vadd.f32 %v99, %v1453
  %v1502 = vadd.f32 %v100, %v1456
  %v1503 = vadd.f32 %v101, %v1461
  %v1504 = vadd.f32 %v102, %v1464
  %v1505 = vadd.f32 %v103, %v1469
  %v1506 = vadd.f32 %v104, %v1472
  %1507 = vst.msk [vmem:[%s12] sm:$0xff] %vm171, %v1475
  %1508 = vst.msk [vmem:[%s12 + $0x8] sm:$0xff] %vm171, %v1476
  %1509 = vst.msk [vmem:[%s12 + $0x10] sm:$0xff] %vm171, %v1477
  %1510 = vst.msk [vmem:[%s12 + $0x18] sm:$0xff] %vm171, %v1478
  %1511 = vst.msk [vmem:[%s12 + $0x20] sm:$0xff] %vm171, %v1479
  %1512 = vst.msk [vmem:[%s12 + $0x28] sm:$0xff] %vm171, %v1480
  %1513 = vst.msk [vmem:[%s12 + $0x30] sm:$0xff] %vm171, %v1481
  %1514 = vst.msk [vmem:[%s12 + $0x38] sm:$0xff] %vm171, %v1482
  %1515 = vst.msk [vmem:[%s12 + $0x40] sm:$0xff] %vm171, %v1483
  %1516 = vst.msk [vmem:[%s12 + $0x48] sm:$0xff] %vm171, %v1484
  %1517 = vst.msk [vmem:[%s12 + $0x50] sm:$0xff] %vm171, %v1485
  %1518 = vst.msk [vmem:[%s12 + $0x58] sm:$0xff] %vm171, %v1486
  %1519 = vst.msk [vmem:[%s12 + $0x60] sm:$0xff] %vm171, %v1487
  %1520 = vst.msk [vmem:[%s12 + $0x68] sm:$0xff] %vm171, %v1488
  %1521 = vst.msk [vmem:[%s12 + $0x70] sm:$0xff] %vm171, %v1489
  %1522 = vst.msk [vmem:[%s12 + $0x78] sm:$0xff] %vm171, %v1490
  %1523 = vst.msk [vmem:[%s12 + $0x80] sm:$0xff] %vm171, %v1491
  %1524 = vst.msk [vmem:[%s12 + $0x88] sm:$0xff] %vm171, %v1492
  %1525 = vst.msk [vmem:[%s12 + $0x90] sm:$0xff] %vm171, %v1493
  %1526 = vst.msk [vmem:[%s12 + $0x98] sm:$0xff] %vm171, %v1494
  %1527 = vst.msk [vmem:[%s12 + $0xa0] sm:$0xff] %vm171, %v1495
  %1528 = vst.msk [vmem:[%s12 + $0xa8] sm:$0xff] %vm171, %v1496
  %1529 = vst.msk [vmem:[%s12 + $0xb0] sm:$0xff] %vm171, %v1497
  %1530 = vst.msk [vmem:[%s12 + $0xb8] sm:$0xff] %vm171, %v1498
  %1531 = vst.msk [vmem:[%s12 + $0xc0] sm:$0xff] %vm171, %v1499
  %1532 = vst.msk [vmem:[%s12 + $0xc8] sm:$0xff] %vm171, %v1500
  %1533 = vst.msk [vmem:[%s12 + $0xd0] sm:$0xff] %vm171, %v1501
  %1534 = vst.msk [vmem:[%s12 + $0xd8] sm:$0xff] %vm171, %v1502
  %1535 = vst.msk [vmem:[%s12 + $0xe0] sm:$0xff] %vm171, %v1503
  %1536 = vst.msk [vmem:[%s12 + $0xe8] sm:$0xff] %vm171, %v1504
  %1537 = vst.msk [vmem:[%s12 + $0xf0] sm:$0xff] %vm171, %v1505
  %1538 = vst.msk [vmem:[%s12 + $0xf8] sm:$0xff] %vm171, %v1506
  // Predicated region
  $region46: #{mujoco_dynamics_forward.1} parent=0 // pred_check
    _
  $region47: #{mujoco_dynamics_forward.1} parent=0 // pred_check_branch
    %1540 = sbr.rel (0) target = $region49
  $region48: #{mujoco_dynamics_forward.1} parent=0 // pred_region
    _
  $region49: #{mujoco_dynamics_forward.1} parent=0 // pred_fallthru
    _
  // Predicated region
  $region50: #{mujoco_dynamics_forward.1} parent=0 // pred_check
    _
  $region51: #{mujoco_dynamics_forward.1} parent=0 // pred_check_branch
    %1542 = sbr.rel (0) target = $region53
  $region52: #{mujoco_dynamics_forward.1} parent=0 // pred_region
    _
  $region53: #{mujoco_dynamics_forward.1} parent=0 // pred_fallthru
    _
  // Predicated region
  $region54: #{mujoco_dynamics_forward.1} parent=0 // pred_check
    _
  $region55: #{mujoco_dynamics_forward.1} parent=0 // pred_check_branch
    %1544 = sbr.rel (0) target = $region57
  $region56: #{mujoco_dynamics_forward.1} parent=0 // pred_region
    _
  $region57: #{mujoco_dynamics_forward.1} parent=0 // pred_fallthru
    _
  // Predicated region
  $region58: #{mujoco_dynamics_forward.1} parent=0 // pred_check
    _
  $region59: #{mujoco_dynamics_forward.1} parent=0 // pred_check_branch
    %1546 = sbr.rel (0) target = $region61
  $region60: #{mujoco_dynamics_forward.1} parent=0 // pred_region
    _
  $region61: #{mujoco_dynamics_forward.1} parent=0 // pred_fallthru
    _

</llo_original>
